<compile_context>
chip_gen: v6e
topology: v6e:2x2x1
jax: 0.10.0
libtpu: 0.0.40
codegen_flags: <defaults>
</compile_context>

<pallas_src>
import functools

import jax
import jax.numpy as jnp
from jax.experimental import pallas as pl
from jax.experimental.pallas import tpu as pltpu

LEAKY_SLOPE = 0.2            # GATConv default negative_slope
TILE_Q = 128                 # attention row tile
TILE_K = 256                 # attention column tile (MXU contraction depth)
PROJ_TILE = 512              # projection row tile
NODE_PAD = 512               # lcm(TILE_Q, TILE_K, PROJ_TILE)
LANE = 128                   # feature lane padding
H_RESIDENT_MAX_BYTES = 12 * 1024 * 1024   # bf16 h residency budget (x2 buffers fits v7x)
ATTEND_VMEM_LIMIT = 40 * 1024 * 1024


def _round_up(v, m):
    return ((v + m - 1) // m) * m


# ----------------------------------------------------------------------------
# Kernel 1: per-layer projection  h = x @ W  (bf16 in, f32 acc, bf16 out)
#           plus per-node attention scalars e_src[i] = a_src.h_i, e_dst[i] = a_dst.h_i.
# ----------------------------------------------------------------------------
def project_kernel(x_ref, w_ref, a_src_ref, a_dst_ref, h_ref, e_src_ref, e_dst_ref):
    h = jnp.dot(x_ref[...], w_ref[...], preferred_element_type=jnp.float32)
    h_ref[...] = h.astype(h_ref.dtype)
    e_src_ref[...] = jnp.sum(h * a_src_ref[...], axis=-1, keepdims=True)
    e_dst_ref[...] = jnp.sum(h * a_dst_ref[...], axis=-1, keepdims=True)


def gat_project(x_p, w_p, a_src_p, a_dst_p):
    n_p, fin_p = x_p.shape
    fout_p = w_p.shape[1]
    grid = (n_p // PROJ_TILE,)
    return pl.pallas_call(
        project_kernel,
        out_shape=(jax.ShapeDtypeStruct((n_p, fout_p), jnp.bfloat16),
                   jax.ShapeDtypeStruct((n_p, 1), jnp.float32),
                   jax.ShapeDtypeStruct((n_p, 1), jnp.float32)),
        grid_spec=pltpu.PrefetchScalarGridSpec(
            num_scalar_prefetch=0,
            grid=grid,
            in_specs=[pl.BlockSpec((PROJ_TILE, fin_p), lambda i: (i, 0)),
                      pl.BlockSpec((fin_p, fout_p), lambda i: (0, 0)),
                      pl.BlockSpec((1, fout_p), lambda i: (0, 0)),
                      pl.BlockSpec((1, fout_p), lambda i: (0, 0))],
            out_specs=(pl.BlockSpec((PROJ_TILE, fout_p), lambda i: (i, 0)),
                       pl.BlockSpec((PROJ_TILE, 1), lambda i: (i, 0)),
                       pl.BlockSpec((PROJ_TILE, 1), lambda i: (i, 0)))),
        compiler_params=pltpu.CompilerParams(dimension_semantics=("parallel",)),
    )(x_p, w_p, a_src_p, a_dst_p)


# ----------------------------------------------------------------------------
# Kernel 2: tiled masked-softmax attention + aggregation (static per-row max).
#   s[i,j] = LeakyReLU(e_dst[i] + e_src[j]);  m_i >= s[i,j] (precomputed)
#   out_i  = (sum_j 1[adj] * exp(s[i,j]-m_i) * h_j) / l_i + bias   [+ ReLU]
# ----------------------------------------------------------------------------
def gat_attend_kernel(h_ref, e_dst_ref, m_ref, e_src_ref, adj_ref, b_ref, out_ref,
                      l_sc, acc_sc, *, apply_relu, h_resident):
    k = pl.program_id(1)

    @pl.when(k == 0)
    def _():
        l_sc[...] = jnp.zeros_like(l_sc)
        acc_sc[...] = jnp.zeros_like(acc_sc)

    # Rank-1 scores; m is a static per-row upper bound so exp(s - m) <= 1
    # (no running max / rescale needed).  All score math stays f32.
    s = e_dst_ref[...] + e_src_ref[...]            # [tq,1]+[1,tk] -> [tq,tk]
    s = jnp.where(s > 0, s, LEAKY_SLOPE * s)
    p = jnp.exp(s - m_ref[...])
    p = jnp.where(adj_ref[...] != 0, p, 0.0)

    if h_resident:
        h_blk = h_ref[pl.ds(pl.multiple_of(k * TILE_K, TILE_K), TILE_K), :]
    else:
        h_blk = h_ref[...]

    l_sc[...] += jnp.sum(p, axis=-1, keepdims=True)
    acc_sc[...] += jnp.dot(p.astype(jnp.bfloat16), h_blk,
                           preferred_element_type=jnp.float32)

    @pl.when(k == pl.num_programs(1) - 1)
    def _():
        # Padded rows have l == 0 (no self-loop); clamp keeps them finite.
        inv = pl.reciprocal(jnp.maximum(l_sc[...], 1e-30), approx=True)
        out = acc_sc[...] * inv + b_ref[...]
        if apply_relu:
            out = jnp.maximum(out, 0.0)
        out_ref[...] = out.astype(out_ref.dtype)


def gat_attend(h_p, e_dst_col, m_col, e_src_row, adj, b_p, *, apply_relu):
    n_p, fout_p = h_p.shape
    grid = (n_p // TILE_Q, n_p // TILE_K)

    # Keep the full bf16 h resident in VMEM when it fits; otherwise stream
    # (TILE_K, fout_p) blocks per column tile.
    # TODO(synk): when streamed on v5e, pipeline_mode=pl.Buffered(3) on h/adj
    # would hide the exposed DMA; resident-h is the default path here.
    h_resident = n_p * fout_p * 2 <= H_RESIDENT_MAX_BYTES
    if h_resident:
        h_spec = pl.BlockSpec((n_p, fout_p), lambda i, k: (0, 0))
    else:
        h_spec = pl.BlockSpec((TILE_K, fout_p), lambda i, k: (k, 0))

    kernel = functools.partial(gat_attend_kernel, apply_relu=apply_relu,
                               h_resident=h_resident)
    return pl.pallas_call(
        kernel,
        out_shape=jax.ShapeDtypeStruct((n_p, fout_p), jnp.bfloat16),
        grid_spec=pltpu.PrefetchScalarGridSpec(
            num_scalar_prefetch=0,
            grid=grid,
            in_specs=[h_spec,                                               # h (sources, bf16)
                      pl.BlockSpec((TILE_Q, 1), lambda i, k: (i, 0)),       # e_dst rows
                      pl.BlockSpec((TILE_Q, 1), lambda i, k: (i, 0)),       # per-row max bound
                      pl.BlockSpec((1, TILE_K), lambda i, k: (0, k)),       # e_src cols
                      pl.BlockSpec((TILE_Q, TILE_K), lambda i, k: (i, k)),  # adj (int8)
                      pl.BlockSpec((1, fout_p), lambda i, k: (0, 0))],      # bias
            out_specs=pl.BlockSpec((TILE_Q, fout_p), lambda i, k: (i, 0)),
            scratch_shapes=[pltpu.VMEM((TILE_Q, 1), jnp.float32),           # l (denominator)
                            pltpu.VMEM((TILE_Q, fout_p), jnp.float32)]),    # acc
        compiler_params=pltpu.CompilerParams(
            dimension_semantics=("parallel", "arbitrary"),
            vmem_limit_bytes=ATTEND_VMEM_LIMIT),
    )(h_p, e_dst_col, m_col, e_src_row, adj, b_p)


# ----------------------------------------------------------------------------
# Parameters (true GATConv shapes, heads=1) and forward pass.
# ----------------------------------------------------------------------------
def init_gat_params(key, in_channels, hidden_channels, num_layers, out_channels):
    dims = []
    for i in range(num_layers):
        fin = in_channels if i == 0 else hidden_channels
        fout = hidden_channels if i < num_layers - 1 else out_channels
        dims.append((fin, fout))
    params = []
    for fin, fout in dims:
        key, k1, k2, k3 = jax.random.split(key, 4)
        w = ((2.0 / (fin + fout)) ** 0.5) * jax.random.normal(k1, (fin, fout), jnp.float32)
        a_src = 0.1 * jax.random.normal(k2, (1, fout), jnp.float32)
        a_dst = 0.1 * jax.random.normal(k3, (1, fout), jnp.float32)
        b = jnp.zeros((1, fout), jnp.float32)
        params.append((w, a_src, a_dst, b))
    return params


def gat_forward(x, edge_index, params):
    """GATWrap.forward(batch) == GAT(x, edge_index)."""
    n, fin = x.shape
    n_p = _round_up(n, NODE_PAD)
    fin_p = _round_up(fin, LANE)

    # Lane-dense, tile-padded bf16 node features (padded rows/lanes are zero).
    h = jnp.zeros((n_p, fin_p), jnp.bfloat16).at[:n, :fin].set(x.astype(jnp.bfloat16))

    # Dense int8 adjacency: adj[i, j] = 1 iff edge j -> i, plus self loops on
    # the real nodes (GATConv add_self_loops=True).  Built once, reused per layer.
    src, dst = edge_index[0], edge_index[1]
    adj = jnp.zeros((n_p, n_p), jnp.int8)
    adj = adj.at[dst, src].set(1)
    idx = jnp.arange(n)
    adj = adj.at[idx, idx].set(1)

    num_layers = len(params)
    for li, (w, a_src, a_dst, b) in enumerate(params):
        f_in, f_out = w.shape
        f_in_p, f_out_p = _round_up(f_in, LANE), _round_up(f_out, LANE)
        # Pre-padded, pre-cast bf16 weights (no per-step cast inside the kernel).
        w_p = jnp.zeros((f_in_p, f_out_p), jnp.bfloat16).at[:f_in, :f_out].set(
            w.astype(jnp.bfloat16))
        a_src_p = jnp.zeros((1, f_out_p), jnp.float32).at[:, :f_out].set(a_src)
        a_dst_p = jnp.zeros((1, f_out_p), jnp.float32).at[:, :f_out].set(a_dst)
        b_p = jnp.zeros((1, f_out_p), jnp.float32).at[:, :f_out].set(b)

        h_proj, e_src, e_dst = gat_project(h, w_p, a_src_p, a_dst_p)

        # Static per-row score upper bound (LeakyReLU is monotone), computed
        # once per layer on tiny n-vectors; replaces the online-softmax max.
        e_src_max = jnp.max(e_src[:n])
        m_col = e_dst + e_src_max
        m_col = jnp.where(m_col > 0, m_col, LEAKY_SLOPE * m_col)
        e_src_row = jnp.reshape(e_src, (1, n_p))   # tiny relayout in XLA glue

        h = gat_attend(h_proj, e_dst, m_col, e_src_row, adj, b_p,
                       apply_relu=(li < num_layers - 1))

    out_c = params[-1][0].shape[1]
    return h[:n, :out_c].astype(jnp.float32)
    # TODO(synk): multi-head (heads>1) concat attention and cross-layer fusion
    # (keeping adj/h resident across layers in one pallas_call) not implemented;
    # matches torch_geometric GAT defaults (heads=1, dropout=0.0, jk=None).


if __name__ == "__main__":
    key = jax.random.PRNGKey(0)
    N = 16
    in_channels, hidden_channels, num_layers, out_channels = 8, 32, 3, 4

    kx, ke, kp = jax.random.split(key, 3)
    x = jax.random.normal(kx, (N, in_channels), jnp.float32)

    # Deterministic directed graph: ring edges + 16 random extra edges.
    src_ring = jnp.arange(N, dtype=jnp.int32)
    dst_ring = (src_ring + 1) % N
    extra_src = jax.random.randint(ke, (16,), 0, N, dtype=jnp.int32)
    extra_dst = jax.random.randint(jax.random.fold_in(ke, 1), (16,), 0, N, dtype=jnp.int32)
    edge_index = jnp.stack([jnp.concatenate([src_ring, extra_src]),
                            jnp.concatenate([dst_ring, extra_dst])])

    params = init_gat_params(kp, in_channels, hidden_channels, num_layers, out_channels)

    out = jax.block_until_ready(gat_forward(x, edge_index, params))
    assert out.shape == (N, out_channels)
    assert bool(jnp.all(jnp.isfinite(out)))
    print("KERNEL_OK")
</pallas_src>

<mosaic_0001>
module attributes {stable_mosaic.version = 11 : i64} {
  func.func @project_kernel(%arg0: i32, %arg1: memref<512x128xbf16, #tpu.memory_space<vmem>>, %arg2: memref<128x128xbf16, #tpu.memory_space<vmem>>, %arg3: memref<1x128xf32, #tpu.memory_space<vmem>>, %arg4: memref<1x128xf32, #tpu.memory_space<vmem>>, %arg5: memref<512x128xbf16, #tpu.memory_space<vmem>>, %arg6: memref<512x1xf32, #tpu.memory_space<vmem>>, %arg7: memref<512x1xf32, #tpu.memory_space<vmem>>) attributes {dimension_semantics = [#tpu.dimension_semantics<parallel>], iteration_bounds = array<i64: 1>, scalar_prefetch = 0 : i64, scratch_operands = 0 : i64, tpu.core_type = #tpu.core_type<tc>, window_params = [{transform_indices = @transform_0, window_bounds = array<i64: 512, 128>}, {pipeline_mode = #tpu.pipeline_mode<synchronous>, transform_indices = @transform_1, window_bounds = array<i64: 128, 128>}, {pipeline_mode = #tpu.pipeline_mode<synchronous>, transform_indices = @transform_2, window_bounds = array<i64: 1, 128>}, {pipeline_mode = #tpu.pipeline_mode<synchronous>, transform_indices = @transform_3, window_bounds = array<i64: 1, 128>}, {transform_indices = @transform_4, window_bounds = array<i64: 512, 128>}, {transform_indices = @transform_5, window_bounds = array<i64: 512, 1>}, {transform_indices = @transform_6, window_bounds = array<i64: 512, 1>}]} {
    %c0 = arith.constant 0 : index
    %c0_0 = arith.constant 0 : index
    %0 = vector.load %arg1[%c0, %c0_0] : memref<512x128xbf16, #tpu.memory_space<vmem>>, vector<512x128xbf16>
    %c0_1 = arith.constant 0 : index
    %c0_2 = arith.constant 0 : index
    %1 = vector.load %arg2[%c0_1, %c0_2] : memref<128x128xbf16, #tpu.memory_space<vmem>>, vector<128x128xbf16>
    %cst = arith.constant dense<0.000000e+00> : vector<512x128xf32>
    %2 = tpu.matmul %0, %1, %cst {dimension_numbers = #tpu.dot_dimension_numbers<[1], [0], [0], [1], [0, 0, 1, 1], [], []>} : vector<512x128xbf16>, vector<128x128xbf16>, vector<512x128xf32> -> vector<512x128xf32>
    %3 = arith.truncf %2 : vector<512x128xf32> to vector<512x128xbf16>
    %c0_3 = arith.constant 0 : index
    %c0_4 = arith.constant 0 : index
    %4 = vector.load %arg5[%c0_3, %c0_4] : memref<512x128xbf16, #tpu.memory_space<vmem>>, vector<512x128xbf16>
    tpu.vector_store %arg5[%c0_3, %c0_4], %3 {strides = array<i32>} : memref<512x128xbf16, #tpu.memory_space<vmem>>, vector<512x128xbf16>,
    %c0_5 = arith.constant 0 : index
    %c0_6 = arith.constant 0 : index
    %5 = vector.load %arg3[%c0_5, %c0_6] : memref<1x128xf32, #tpu.memory_space<vmem>>, vector<1x128xf32>
    %6 = vector.broadcast %5 : vector<1x128xf32> to vector<512x128xf32>
    %7 = arith.mulf %2, %6 : vector<512x128xf32>
    %cst_7 = arith.constant dense<0.000000e+00> : vector<512xf32>
    %8 = vector.multi_reduction <add>, %7, %cst_7 [1] : vector<512x128xf32> to vector<512xf32>
    %9 = vector.shape_cast %8 : vector<512xf32> to vector<512x1xf32>
    %c0_8 = arith.constant 0 : index
    %c0_9 = arith.constant 0 : index
    %10 = vector.load %arg6[%c0_8, %c0_9] : memref<512x1xf32, #tpu.memory_space<vmem>>, vector<512x1xf32>
    tpu.vector_store %arg6[%c0_8, %c0_9], %9 {strides = array<i32>} : memref<512x1xf32, #tpu.memory_space<vmem>>, vector<512x1xf32>,
    %c0_10 = arith.constant 0 : index
    %c0_11 = arith.constant 0 : index
    %11 = vector.load %arg4[%c0_10, %c0_11] : memref<1x128xf32, #tpu.memory_space<vmem>>, vector<1x128xf32>
    %12 = vector.broadcast %11 : vector<1x128xf32> to vector<512x128xf32>
    %13 = arith.mulf %2, %12 : vector<512x128xf32>
    %cst_12 = arith.constant dense<0.000000e+00> : vector<512xf32>
    %14 = vector.multi_reduction <add>, %13, %cst_12 [1] : vector<512x128xf32> to vector<512xf32>
    %15 = vector.shape_cast %14 : vector<512xf32> to vector<512x1xf32>
    %c0_13 = arith.constant 0 : index
    %c0_14 = arith.constant 0 : index
    %16 = vector.load %arg7[%c0_13, %c0_14] : memref<512x1xf32, #tpu.memory_space<vmem>>, vector<512x1xf32>
    tpu.vector_store %arg7[%c0_13, %c0_14], %15 {strides = array<i32>} : memref<512x1xf32, #tpu.memory_space<vmem>>, vector<512x1xf32>,
    return
  }
  func.func @transform_0(%arg0: i32) -> (i32, i32) {
    %c0_i32 = arith.constant 0 : i32
    %c0_i32_0 = arith.constant 0 : i32
    return %arg0, %c0_i32 : i32, i32
  }
  func.func @transform_1(%arg0: i32) -> (i32, i32) {
    %c0_i32 = arith.constant 0 : i32
    %c0_i32_0 = arith.constant 0 : i32
    %c0_i32_1 = arith.constant 0 : i32
    return %c0_i32, %c0_i32_0 : i32, i32
  }
  func.func @transform_2(%arg0: i32) -> (i32, i32) {
    %c0_i32 = arith.constant 0 : i32
    %c0_i32_0 = arith.constant 0 : i32
    %c0_i32_1 = arith.constant 0 : i32
    return %c0_i32, %c0_i32_0 : i32, i32
  }
  func.func @transform_3(%arg0: i32) -> (i32, i32) {
    %c0_i32 = arith.constant 0 : i32
    %c0_i32_0 = arith.constant 0 : i32
    %c0_i32_1 = arith.constant 0 : i32
    return %c0_i32, %c0_i32_0 : i32, i32
  }
  func.func @transform_4(%arg0: i32) -> (i32, i32) {
    %c0_i32 = arith.constant 0 : i32
    %c0_i32_0 = arith.constant 0 : i32
    return %arg0, %c0_i32 : i32, i32
  }
  func.func @transform_5(%arg0: i32) -> (i32, i32) {
    %c0_i32 = arith.constant 0 : i32
    %c0_i32_0 = arith.constant 0 : i32
    return %arg0, %c0_i32 : i32, i32
  }
  func.func @transform_6(%arg0: i32) -> (i32, i32) {
    %c0_i32 = arith.constant 0 : i32
    %c0_i32_0 = arith.constant 0 : i32
    return %arg0, %c0_i32 : i32, i32
  }
}

</mosaic_0001>

<llo_original>
// kernel: tpu_custom_call.1
$region0: #{tpu_custom_call.1}
  #allocation0 [shape = 'u32[]', space=smem, size = 0x4, offset = 0x4, fixed_abs, tag = 'smem constant byte address 0x4 - core index']
  #allocation1 [shape = 'u32[144,128]{1,0:T(1,128)}', space=vmem, size = 0x12000, scoped, tag = 'internal scratch']
  %s0 = inlined_call_operand.hbm [shape: bf16[512,128], index: 0, kind: input, shape index: {}]
  %s1 = inlined_call_operand.hbm [shape: bf16[128,128], index: 1, kind: input, shape index: {}]
  %s2 = inlined_call_operand.vmem [shape: f32[1,128], index: 2, kind: input, shape index: {}]
  %s3 = inlined_call_operand.vmem [shape: f32[1,128], index: 3, kind: input, shape index: {}]
  %s4 = inlined_call_operand.hbm [shape: bf16[512,128], index: 4, kind: output, shape index: {0}]
  %s5 = inlined_call_operand.vmem [shape: f32[512,1], index: 5, kind: output, shape index: {1}]
  %s6 = inlined_call_operand.vmem [shape: f32[512,1], index: 6, kind: output, shape index: {2}]
  %7 = xla_tuple %s4, %s5, %s6
  %s8 = sld [smem:[#allocation0]]
  $region50: #{tpu_custom_call.1} parent=0
    _
  %s10 = ssub.s32 1, %s8
  %s11 = scalar_select 0, %s10, %s8
  $region1: #{tpu_custom_call.1} parent=0
    #allocation2 [shape = 'u8[131072]{0}', space=vmem, size = 0x20000, scoped, tag = 'input window, operand 0, single buffered']
    #allocation3 [shape = 's32[1]{0}', space=sflag, size = 0x4, scoped, tag = 'scoped memory for tpu_custom_call.1']
    #allocation4 [shape = 's32[1]{0}', space=sflag, size = 0x4, scoped, tag = 'scoped memory for tpu_custom_call.1']
    #allocation5 [shape = 'u8[32768]{0}', space=vmem, size = 0x8000, scoped, tag = 'input window, operand 1, single buffered']
    #allocation6 [shape = 's32[1]{0}', space=sflag, size = 0x4, scoped, tag = 'scoped memory for tpu_custom_call.1']
    #allocation7 [shape = 'u8[131072]{0}', space=vmem, size = 0x20000, scoped, tag = 'output window, operand 0, single buffered']
    %12 = vsyncpa [#allocation3], 0
    %13 = vsyncpa [#allocation6], 0
    %14 = vsyncpa [#allocation4], 0
    // Predicated region
    $region2: #{tpu_custom_call.1} parent=1 // pred_check
      _
    $region3: #{tpu_custom_call.1} parent=1 // pred_check_branch
      %16 = sbr.rel (0) target = $region5
    $region4: #{tpu_custom_call.1} parent=1 // pred_region
      %s18 = ssub.s32 4096, 4096
      %19 = vsyncadd [#allocation3], %s18
      %s20 = sshll.u32 [#allocation2], 4
      %s21 = int_to_ptr.vmem [resolvable:$true] %s20
      %26 = dma.hbm_to_vmem [thread:$0]  %s0, 4096, %s21, [#allocation3], 64, 64, 4
    $region5: #{tpu_custom_call.1} parent=1 // pred_fallthru
      _
    // Predicated region
    $region6: #{tpu_custom_call.1} parent=1 // pred_check
      _
    $region7: #{tpu_custom_call.1} parent=1 // pred_check_branch
      %28 = sbr.rel (0) target = $region9
    $region8: #{tpu_custom_call.1} parent=1 // pred_region
      %s30 = ssub.s32 1024, 1024
      %31 = vsyncadd [#allocation6], %s30
      %s32 = sshll.u32 [#allocation5], 4
      %s33 = int_to_ptr.vmem [resolvable:$true] %s32
      %38 = dma.hbm_to_vmem [thread:$0]  %s1, 1024, %s33, [#allocation6], 64, 64, 4
    $region9: #{tpu_custom_call.1} parent=1 // pred_fallthru
      _
    // Predicated region
    $region10: #{tpu_custom_call.1} parent=1 // pred_check
      _
    $region11: #{tpu_custom_call.1} parent=1 // pred_check_branch
      %40 = sbr.rel (0) target = $region13
    $region12: #{tpu_custom_call.1} parent=1 // pred_region
      _
    $region13: #{tpu_custom_call.1} parent=1 // pred_fallthru
      _
    // Predicated region
    $region14: #{tpu_custom_call.1} parent=1 // pred_check
      _
    $region15: #{tpu_custom_call.1} parent=1 // pred_check_branch
      %42 = sbr.rel (0) target = $region17
    $region16: #{tpu_custom_call.1} parent=1 // pred_region
      _
    $region17: #{tpu_custom_call.1} parent=1 // pred_fallthru
      _
    // Predicated region
    $region18: #{tpu_custom_call.1} parent=1 // pred_check
      _
    $region19: #{tpu_custom_call.1} parent=1 // pred_check_branch
      %44 = sbr.rel (0) target = $region21
    $region20: #{tpu_custom_call.1} parent=1 // pred_region
      %45 = dma.done [#allocation3], 4096
    $region21: #{tpu_custom_call.1} parent=1 // pred_fallthru
      _
    // Predicated region
    $region22: #{tpu_custom_call.1} parent=1 // pred_check
      _
    $region23: #{tpu_custom_call.1} parent=1 // pred_check_branch
      %47 = sbr.rel (0) target = $region25
    $region24: #{tpu_custom_call.1} parent=1 // pred_region
      %48 = dma.done [#allocation6], 1024
    $region25: #{tpu_custom_call.1} parent=1 // pred_fallthru
      _
    %v50 = vld [vmem:[#allocation2] sm:$0xf]
    %v51 = vld [vmem:[#allocation2 + $0x4] sm:$0xf]
    %v52 = vld [vmem:[#allocation2 + $0x8] sm:$0xf]
    %v53 = vld [vmem:[#allocation2 + $0xc] sm:$0xf]
    %v54 = vld [vmem:[#allocation2 + $0x10] sm:$0xf]
    %v55 = vld [vmem:[#allocation2 + $0x14] sm:$0xf]
    %v56 = vld [vmem:[#allocation2 + $0x18] sm:$0xf]
    %v57 = vld [vmem:[#allocation2 + $0x1c] sm:$0xf]
    %v58 = vld [vmem:[#allocation2 + $0x20] sm:$0xf]
    %v59 = vld [vmem:[#allocation2 + $0x24] sm:$0xf]
    %v60 = vld [vmem:[#allocation2 + $0x28] sm:$0xf]
    %v61 = vld [vmem:[#allocation2 + $0x2c] sm:$0xf]
    %v62 = vld [vmem:[#allocation2 + $0x30] sm:$0xf]
    %v63 = vld [vmem:[#allocation2 + $0x34] sm:$0xf]
    %v64 = vld [vmem:[#allocation2 + $0x38] sm:$0xf]
    %v65 = vld [vmem:[#allocation2 + $0x3c] sm:$0xf]
    %v66 = vld [vmem:[#allocation2 + $0x40] sm:$0xf]
    %v67 = vld [vmem:[#allocation2 + $0x44] sm:$0xf]
    %v68 = vld [vmem:[#allocation2 + $0x48] sm:$0xf]
    %v69 = vld [vmem:[#allocation2 + $0x4c] sm:$0xf]
    %v70 = vld [vmem:[#allocation2 + $0x50] sm:$0xf]
    %v71 = vld [vmem:[#allocation2 + $0x54] sm:$0xf]
    %v72 = vld [vmem:[#allocation2 + $0x58] sm:$0xf]
    %v73 = vld [vmem:[#allocation2 + $0x5c] sm:$0xf]
    %v74 = vld [vmem:[#allocation2 + $0x60] sm:$0xf]
    %v75 = vld [vmem:[#allocation2 + $0x64] sm:$0xf]
    %v76 = vld [vmem:[#allocation2 + $0x68] sm:$0xf]
    %v77 = vld [vmem:[#allocation2 + $0x6c] sm:$0xf]
    %v78 = vld [vmem:[#allocation2 + $0x70] sm:$0xf]
    %v79 = vld [vmem:[#allocation2 + $0x74] sm:$0xf]
    %v80 = vld [vmem:[#allocation2 + $0x78] sm:$0xf]
    %v81 = vld [vmem:[#allocation2 + $0x7c] sm:$0xf]
    %v82 = vld [vmem:[#allocation2 + $0x80] sm:$0xf]
    %v83 = vld [vmem:[#allocation2 + $0x84] sm:$0xf]
    %v84 = vld [vmem:[#allocation2 + $0x88] sm:$0xf]
    %v85 = vld [vmem:[#allocation2 + $0x8c] sm:$0xf]
    %v86 = vld [vmem:[#allocation2 + $0x90] sm:$0xf]
    %v87 = vld [vmem:[#allocation2 + $0x94] sm:$0xf]
    %v88 = vld [vmem:[#allocation2 + $0x98] sm:$0xf]
    %v89 = vld [vmem:[#allocation2 + $0x9c] sm:$0xf]
    %v90 = vld [vmem:[#allocation2 + $0xa0] sm:$0xf]
    %v91 = vld [vmem:[#allocation2 + $0xa4] sm:$0xf]
    %v92 = vld [vmem:[#allocation2 + $0xa8] sm:$0xf]
    %v93 = vld [vmem:[#allocation2 + $0xac] sm:$0xf]
    %v94 = vld [vmem:[#allocation2 + $0xb0] sm:$0xf]
    %v95 = vld [vmem:[#allocation2 + $0xb4] sm:$0xf]
    %v96 = vld [vmem:[#allocation2 + $0xb8] sm:$0xf]
    %v97 = vld [vmem:[#allocation2 + $0xbc] sm:$0xf]
    %v98 = vld [vmem:[#allocation2 + $0xc0] sm:$0xf]
    %v99 = vld [vmem:[#allocation2 + $0xc4] sm:$0xf]
    %v100 = vld [vmem:[#allocation2 + $0xc8] sm:$0xf]
    %v101 = vld [vmem:[#allocation2 + $0xcc] sm:$0xf]
    %v102 = vld [vmem:[#allocation2 + $0xd0] sm:$0xf]
    %v103 = vld [vmem:[#allocation2 + $0xd4] sm:$0xf]
    %v104 = vld [vmem:[#allocation2 + $0xd8] sm:$0xf]
    %v105 = vld [vmem:[#allocation2 + $0xdc] sm:$0xf]
    %v106 = vld [vmem:[#allocation2 + $0xe0] sm:$0xf]
    %v107 = vld [vmem:[#allocation2 + $0xe4] sm:$0xf]
    %v108 = vld [vmem:[#allocation2 + $0xe8] sm:$0xf]
    %v109 = vld [vmem:[#allocation2 + $0xec] sm:$0xf]
    %v110 = vld [vmem:[#allocation2 + $0xf0] sm:$0xf]
    %v111 = vld [vmem:[#allocation2 + $0xf4] sm:$0xf]
    %v112 = vld [vmem:[#allocation2 + $0xf8] sm:$0xf]
    %v113 = vld [vmem:[#allocation2 + $0xfc] sm:$0xf]
    %v114 = vld [vmem:[#allocation5] sm:$0xf]
    %v115 = vld [vmem:[#allocation5 + $0x4] sm:$0xf]
    %v116 = vld [vmem:[#allocation5 + $0x8] sm:$0xf]
    %v117 = vld [vmem:[#allocation5 + $0xc] sm:$0xf]
    %v118 = vld [vmem:[#allocation5 + $0x10] sm:$0xf]
    %v119 = vld [vmem:[#allocation5 + $0x14] sm:$0xf]
    %v120 = vld [vmem:[#allocation5 + $0x18] sm:$0xf]
    %v121 = vld [vmem:[#allocation5 + $0x1c] sm:$0xf]
    %v122 = vld [vmem:[#allocation5 + $0x20] sm:$0xf]
    %v123 = vld [vmem:[#allocation5 + $0x24] sm:$0xf]
    %v124 = vld [vmem:[#allocation5 + $0x28] sm:$0xf]
    %v125 = vld [vmem:[#allocation5 + $0x2c] sm:$0xf]
    %v126 = vld [vmem:[#allocation5 + $0x30] sm:$0xf]
    %v127 = vld [vmem:[#allocation5 + $0x34] sm:$0xf]
    %v128 = vld [vmem:[#allocation5 + $0x38] sm:$0xf]
    %v129 = vld [vmem:[#allocation5 + $0x3c] sm:$0xf]
    %v194 = vunpack.c.l.b16 %v50
    %v195 = vunpack.c.l.b16 %v51
    %v196 = vunpack.c.l.b16 %v52
    %v197 = vunpack.c.l.b16 %v53
    %v198 = vunpack.c.l.b16 %v54
    %v199 = vunpack.c.l.b16 %v55
    %v200 = vunpack.c.l.b16 %v56
    %v201 = vunpack.c.l.b16 %v57
    %v202 = vunpack.c.l.b16 %v58
    %v203 = vunpack.c.l.b16 %v59
    %v204 = vunpack.c.l.b16 %v60
    %v205 = vunpack.c.l.b16 %v61
    %v206 = vunpack.c.l.b16 %v62
    %v207 = vunpack.c.l.b16 %v63
    %v208 = vunpack.c.l.b16 %v64
    %v209 = vunpack.c.l.b16 %v65
    %v210 = vunpack.c.l.b16 %v66
    %v211 = vunpack.c.l.b16 %v67
    %v212 = vunpack.c.l.b16 %v68
    %v213 = vunpack.c.l.b16 %v69
    %v214 = vunpack.c.l.b16 %v70
    %v215 = vunpack.c.l.b16 %v71
    %v216 = vunpack.c.l.b16 %v72
    %v217 = vunpack.c.l.b16 %v73
    %v218 = vunpack.c.l.b16 %v74
    %v219 = vunpack.c.l.b16 %v75
    %v220 = vunpack.c.l.b16 %v76
    %v221 = vunpack.c.l.b16 %v77
    %v222 = vunpack.c.l.b16 %v78
    %v223 = vunpack.c.l.b16 %v79
    %v224 = vunpack.c.l.b16 %v80
    %v225 = vunpack.c.l.b16 %v81
    %v226 = vunpack.c.l.b16 %v82
    %v227 = vunpack.c.l.b16 %v83
    %v228 = vunpack.c.l.b16 %v84
    %v229 = vunpack.c.l.b16 %v85
    %v230 = vunpack.c.l.b16 %v86
    %v231 = vunpack.c.l.b16 %v87
    %v232 = vunpack.c.l.b16 %v88
    %v233 = vunpack.c.l.b16 %v89
    %v234 = vunpack.c.l.b16 %v90
    %v235 = vunpack.c.l.b16 %v91
    %v236 = vunpack.c.l.b16 %v92
    %v237 = vunpack.c.l.b16 %v93
    %v238 = vunpack.c.l.b16 %v94
    %v239 = vunpack.c.l.b16 %v95
    %v240 = vunpack.c.l.b16 %v96
    %v241 = vunpack.c.l.b16 %v97
    %v242 = vunpack.c.l.b16 %v98
    %v243 = vunpack.c.l.b16 %v99
    %v244 = vunpack.c.l.b16 %v100
    %v245 = vunpack.c.l.b16 %v101
    %v246 = vunpack.c.l.b16 %v102
    %v247 = vunpack.c.l.b16 %v103
    %v248 = vunpack.c.l.b16 %v104
    %v249 = vunpack.c.l.b16 %v105
    %v250 = vunpack.c.l.b16 %v106
    %v251 = vunpack.c.l.b16 %v107
    %v252 = vunpack.c.l.b16 %v108
    %v253 = vunpack.c.l.b16 %v109
    %v254 = vunpack.c.l.b16 %v110
    %v255 = vunpack.c.l.b16 %v111
    %v256 = vunpack.c.l.b16 %v112
    %v257 = vunpack.c.l.b16 %v113
    %v258 = vpack.c.b16 %v195, %v194
    %v259 = vpack.c.b16 %v197, %v196
    %v260 = vpack.c.b16 %v199, %v198
    %v261 = vpack.c.b16 %v201, %v200
    %v262 = vpack.c.b16 %v203, %v202
    %v263 = vpack.c.b16 %v205, %v204
    %v264 = vpack.c.b16 %v207, %v206
    %v265 = vpack.c.b16 %v209, %v208
    %v266 = vpack.c.b16 %v211, %v210
    %v267 = vpack.c.b16 %v213, %v212
    %v268 = vpack.c.b16 %v215, %v214
    %v269 = vpack.c.b16 %v217, %v216
    %v270 = vpack.c.b16 %v219, %v218
    %v271 = vpack.c.b16 %v221, %v220
    %v272 = vpack.c.b16 %v223, %v222
    %v273 = vpack.c.b16 %v225, %v224
    %v274 = vpack.c.b16 %v227, %v226
    %v275 = vpack.c.b16 %v229, %v228
    %v276 = vpack.c.b16 %v231, %v230
    %v277 = vpack.c.b16 %v233, %v232
    %v278 = vpack.c.b16 %v235, %v234
    %v279 = vpack.c.b16 %v237, %v236
    %v280 = vpack.c.b16 %v239, %v238
    %v281 = vpack.c.b16 %v241, %v240
    %v282 = vpack.c.b16 %v243, %v242
    %v283 = vpack.c.b16 %v245, %v244
    %v284 = vpack.c.b16 %v247, %v246
    %v285 = vpack.c.b16 %v249, %v248
    %v286 = vpack.c.b16 %v251, %v250
    %v287 = vpack.c.b16 %v253, %v252
    %v288 = vpack.c.b16 %v255, %v254
    %v289 = vpack.c.b16 %v257, %v256
    %v338 = vunpack.c.l.b16 %v114
    %v339 = vunpack.c.l.b16 %v115
    %v340 = vunpack.c.l.b16 %v116
    %v341 = vunpack.c.l.b16 %v117
    %v342 = vunpack.c.l.b16 %v118
    %v343 = vunpack.c.l.b16 %v119
    %v344 = vunpack.c.l.b16 %v120
    %v345 = vunpack.c.l.b16 %v121
    %v346 = vunpack.c.l.b16 %v122
    %v347 = vunpack.c.l.b16 %v123
    %v348 = vunpack.c.l.b16 %v124
    %v349 = vunpack.c.l.b16 %v125
    %v350 = vunpack.c.l.b16 %v126
    %v351 = vunpack.c.l.b16 %v127
    %v352 = vunpack.c.l.b16 %v128
    %v353 = vunpack.c.l.b16 %v129
    %v354 = vpack.c.b16 %v339, %v338
    %v355 = vpack.c.b16 %v341, %v340
    %v356 = vpack.c.b16 %v343, %v342
    %v357 = vpack.c.b16 %v345, %v344
    %v358 = vpack.c.b16 %v347, %v346
    %v359 = vpack.c.b16 %v349, %v348
    %v360 = vpack.c.b16 %v351, %v350
    %v361 = vpack.c.b16 %v353, %v352
    %370 = vmatprep.subr.bf16.mxu0 0
    %371 = vmatpush1.bf16.msra.mxu0 %v361
    %372 = vmatprep.subr.bf16.mxu0 0
    %373 = vmatpush1.bf16.msra.mxu0 %v360
    %374 = vmatprep.subr.bf16.mxu0 0
    %375 = vmatpush1.bf16.msra.mxu0 %v359
    %376 = vmatprep.subr.bf16.mxu0 0
    %377 = vmatpush1.bf16.msra.mxu0 %v358
    %378 = vmatprep.subr.bf16.mxu0 0
    %379 = vmatpush1.bf16.msra.mxu0 %v357
    %380 = vmatprep.subr.bf16.mxu0 0
    %381 = vmatpush1.bf16.msra.mxu0 %v356
    %382 = vmatprep.subr.bf16.mxu0 0
    %383 = vmatpush1.bf16.msra.mxu0 %v355
    %384 = vmatprep.subr.bf16.mxu0 0
    %385 = vmatpush1.bf16.msra.mxu0 %v354
    %386 = vmatprep.subr.bf16.mxu0 0
    %387 = vmatpush2.bf16.msra.mxu0 0
    %388 = vmatprep.subr.bf16.mxu0 0
    %389 = vmatpush2.bf16.msra.mxu0 0
    %390 = vmatprep.subr.bf16.mxu0 0
    %391 = vmatpush2.bf16.msra.mxu0 0
    %392 = vmatprep.subr.bf16.mxu0 0
    %393 = vmatpush2.bf16.msra.mxu0 0
    %394 = vmatprep.subr.bf16.mxu0 0
    %395 = vmatpush2.bf16.msra.mxu0 0
    %396 = vmatprep.subr.bf16.mxu0 0
    %397 = vmatpush2.bf16.msra.mxu0 0
    %398 = vmatprep.subr.bf16.mxu0 0
    %399 = vmatpush2.bf16.msra.mxu0 0
    %400 = vmatprep.subr.bf16.mxu0 0
    %401 = vmatpush2.bf16.msra.mxu0 0
    %402 = vmatprep.mubr.bf16.mxu0 0
    %403 = vmatmul.mubr.bf16.gmra.mxu0 %v258
    %v404 = vpop.f32.mrf.mxu0
    %v405 = vadd.f32 0.0, %v404
    %v406 = vpop.f32.mrf.mxu0
    %v407 = vpop.f32.mrf.mxu0
    %v408 = vadd.f32 0.0, %v407
    %v409 = vpop.f32.mrf.mxu0
    %410 = vmatprep.mubr.bf16.mxu0 0
    %411 = vmatmul.mubr.bf16.gmra.mxu0 %v259
    %v412 = vpop.f32.mrf.mxu0
    %v413 = vadd.f32 0.0, %v412
    %v414 = vpop.f32.mrf.mxu0
    %v415 = vpop.f32.mrf.mxu0
    %v416 = vadd.f32 0.0, %v415
    %v417 = vpop.f32.mrf.mxu0
    %418 = vmatprep.mubr.bf16.mxu0 0
    %419 = vmatmul.mubr.bf16.gmra.mxu0 %v260
    %v420 = vpop.f32.mrf.mxu0
    %v421 = vadd.f32 0.0, %v420
    %v422 = vpop.f32.mrf.mxu0
    %v423 = vpop.f32.mrf.mxu0
    %v424 = vadd.f32 0.0, %v423
    %v425 = vpop.f32.mrf.mxu0
    %426 = vmatprep.mubr.bf16.mxu0 0
    %427 = vmatmul.mubr.bf16.gmra.mxu0 %v261
    %v428 = vpop.f32.mrf.mxu0
    %v429 = vadd.f32 0.0, %v428
    %v430 = vpop.f32.mrf.mxu0
    %v431 = vpop.f32.mrf.mxu0
    %v432 = vadd.f32 0.0, %v431
    %v433 = vpop.f32.mrf.mxu0
    %434 = vmatprep.mubr.bf16.mxu0 0
    %435 = vmatmul.mubr.bf16.gmra.mxu0 %v262
    %v436 = vpop.f32.mrf.mxu0
    %v437 = vadd.f32 0.0, %v436
    %v438 = vpop.f32.mrf.mxu0
    %v439 = vpop.f32.mrf.mxu0
    %v440 = vadd.f32 0.0, %v439
    %v441 = vpop.f32.mrf.mxu0
    %442 = vmatprep.mubr.bf16.mxu0 0
    %443 = vmatmul.mubr.bf16.gmra.mxu0 %v263
    %v444 = vpop.f32.mrf.mxu0
    %v445 = vadd.f32 0.0, %v444
    %v446 = vpop.f32.mrf.mxu0
    %v447 = vpop.f32.mrf.mxu0
    %v448 = vadd.f32 0.0, %v447
    %v449 = vpop.f32.mrf.mxu0
    %450 = vmatprep.mubr.bf16.mxu0 0
    %451 = vmatmul.mubr.bf16.gmra.mxu0 %v264
    %v452 = vpop.f32.mrf.mxu0
    %v453 = vadd.f32 0.0, %v452
    %v454 = vpop.f32.mrf.mxu0
    %v455 = vpop.f32.mrf.mxu0
    %v456 = vadd.f32 0.0, %v455
    %v457 = vpop.f32.mrf.mxu0
    %458 = vmatprep.mubr.bf16.mxu0 0
    %459 = vmatmul.mubr.bf16.gmra.mxu0 %v265
    %v460 = vpop.f32.mrf.mxu0
    %v461 = vadd.f32 0.0, %v460
    %v462 = vpop.f32.mrf.mxu0
    %v463 = vpop.f32.mrf.mxu0
    %v464 = vadd.f32 0.0, %v463
    %v465 = vpop.f32.mrf.mxu0
    %466 = vmatprep.mubr.bf16.mxu0 0
    %467 = vmatmul.mubr.bf16.gmra.mxu0 %v266
    %v468 = vpop.f32.mrf.mxu0
    %v469 = vadd.f32 0.0, %v468
    %v470 = vpop.f32.mrf.mxu0
    %v471 = vpop.f32.mrf.mxu0
    %v472 = vadd.f32 0.0, %v471
    %v473 = vpop.f32.mrf.mxu0
    %474 = vmatprep.mubr.bf16.mxu0 0
    %475 = vmatmul.mubr.bf16.gmra.mxu0 %v267
    %v476 = vpop.f32.mrf.mxu0
    %v477 = vadd.f32 0.0, %v476
    %v478 = vpop.f32.mrf.mxu0
    %v479 = vpop.f32.mrf.mxu0
    %v480 = vadd.f32 0.0, %v479
    %v481 = vpop.f32.mrf.mxu0
    %482 = vmatprep.mubr.bf16.mxu0 0
    %483 = vmatmul.mubr.bf16.gmra.mxu0 %v268
    %v484 = vpop.f32.mrf.mxu0
    %v485 = vadd.f32 0.0, %v484
    %v486 = vpop.f32.mrf.mxu0
    %v487 = vpop.f32.mrf.mxu0
    %v488 = vadd.f32 0.0, %v487
    %v489 = vpop.f32.mrf.mxu0
    %490 = vmatprep.mubr.bf16.mxu0 0
    %491 = vmatmul.mubr.bf16.gmra.mxu0 %v269
    %v492 = vpop.f32.mrf.mxu0
    %v493 = vadd.f32 0.0, %v492
    %v494 = vpop.f32.mrf.mxu0
    %v495 = vpop.f32.mrf.mxu0
    %v496 = vadd.f32 0.0, %v495
    %v497 = vpop.f32.mrf.mxu0
    %498 = vmatprep.mubr.bf16.mxu0 0
    %499 = vmatmul.mubr.bf16.gmra.mxu0 %v270
    %v500 = vpop.f32.mrf.mxu0
    %v501 = vadd.f32 0.0, %v500
    %v502 = vpop.f32.mrf.mxu0
    %v503 = vpop.f32.mrf.mxu0
    %v504 = vadd.f32 0.0, %v503
    %v505 = vpop.f32.mrf.mxu0
    %506 = vmatprep.mubr.bf16.mxu0 0
    %507 = vmatmul.mubr.bf16.gmra.mxu0 %v271
    %v508 = vpop.f32.mrf.mxu0
    %v509 = vadd.f32 0.0, %v508
    %v510 = vpop.f32.mrf.mxu0
    %v511 = vpop.f32.mrf.mxu0
    %v512 = vadd.f32 0.0, %v511
    %v513 = vpop.f32.mrf.mxu0
    %514 = vmatprep.mubr.bf16.mxu0 0
    %515 = vmatmul.mubr.bf16.gmra.mxu0 %v272
    %v516 = vpop.f32.mrf.mxu0
    %v517 = vadd.f32 0.0, %v516
    %v518 = vpop.f32.mrf.mxu0
    %v519 = vpop.f32.mrf.mxu0
    %v520 = vadd.f32 0.0, %v519
    %v521 = vpop.f32.mrf.mxu0
    %522 = vmatprep.mubr.bf16.mxu0 0
    %523 = vmatmul.mubr.bf16.gmra.mxu0 %v273
    %v524 = vpop.f32.mrf.mxu0
    %v525 = vadd.f32 0.0, %v524
    %v526 = vpop.f32.mrf.mxu0
    %v527 = vpop.f32.mrf.mxu0
    %v528 = vadd.f32 0.0, %v527
    %v529 = vpop.f32.mrf.mxu0
    %530 = vmatprep.mubr.bf16.mxu0 0
    %531 = vmatmul.mubr.bf16.gmra.mxu0 %v274
    %v532 = vpop.f32.mrf.mxu0
    %v533 = vadd.f32 0.0, %v532
    %v534 = vpop.f32.mrf.mxu0
    %v535 = vpop.f32.mrf.mxu0
    %v536 = vadd.f32 0.0, %v535
    %v537 = vpop.f32.mrf.mxu0
    %538 = vmatprep.mubr.bf16.mxu0 0
    %539 = vmatmul.mubr.bf16.gmra.mxu0 %v275
    %v540 = vpop.f32.mrf.mxu0
    %v541 = vadd.f32 0.0, %v540
    %v542 = vpop.f32.mrf.mxu0
    %v543 = vpop.f32.mrf.mxu0
    %v544 = vadd.f32 0.0, %v543
    %v545 = vpop.f32.mrf.mxu0
    %546 = vmatprep.mubr.bf16.mxu0 0
    %547 = vmatmul.mubr.bf16.gmra.mxu0 %v276
    %v548 = vpop.f32.mrf.mxu0
    %v549 = vadd.f32 0.0, %v548
    %v550 = vpop.f32.mrf.mxu0
    %v551 = vpop.f32.mrf.mxu0
    %v552 = vadd.f32 0.0, %v551
    %v553 = vpop.f32.mrf.mxu0
    %554 = vmatprep.mubr.bf16.mxu0 0
    %555 = vmatmul.mubr.bf16.gmra.mxu0 %v277
    %v556 = vpop.f32.mrf.mxu0
    %v557 = vadd.f32 0.0, %v556
    %v558 = vpop.f32.mrf.mxu0
    %v559 = vpop.f32.mrf.mxu0
    %v560 = vadd.f32 0.0, %v559
    %v561 = vpop.f32.mrf.mxu0
    %562 = vmatprep.mubr.bf16.mxu0 0
    %563 = vmatmul.mubr.bf16.gmra.mxu0 %v278
    %v564 = vpop.f32.mrf.mxu0
    %v565 = vadd.f32 0.0, %v564
    %v566 = vpop.f32.mrf.mxu0
    %v567 = vpop.f32.mrf.mxu0
    %v568 = vadd.f32 0.0, %v567
    %v569 = vpop.f32.mrf.mxu0
    %570 = vmatprep.mubr.bf16.mxu0 0
    %571 = vmatmul.mubr.bf16.gmra.mxu0 %v279
    %v572 = vpop.f32.mrf.mxu0
    %v573 = vadd.f32 0.0, %v572
    %v574 = vpop.f32.mrf.mxu0
    %v575 = vpop.f32.mrf.mxu0
    %v576 = vadd.f32 0.0, %v575
    %v577 = vpop.f32.mrf.mxu0
    %578 = vmatprep.mubr.bf16.mxu0 0
    %579 = vmatmul.mubr.bf16.gmra.mxu0 %v280
    %v580 = vpop.f32.mrf.mxu0
    %v581 = vadd.f32 0.0, %v580
    %v582 = vpop.f32.mrf.mxu0
    %v583 = vpop.f32.mrf.mxu0
    %v584 = vadd.f32 0.0, %v583
    %v585 = vpop.f32.mrf.mxu0
    %586 = vmatprep.mubr.bf16.mxu0 0
    %587 = vmatmul.mubr.bf16.gmra.mxu0 %v281
    %v588 = vpop.f32.mrf.mxu0
    %v589 = vadd.f32 0.0, %v588
    %v590 = vpop.f32.mrf.mxu0
    %v591 = vpop.f32.mrf.mxu0
    %v592 = vadd.f32 0.0, %v591
    %v593 = vpop.f32.mrf.mxu0
    %594 = vmatprep.mubr.bf16.mxu0 0
    %595 = vmatmul.mubr.bf16.gmra.mxu0 %v282
    %v596 = vpop.f32.mrf.mxu0
    %v597 = vadd.f32 0.0, %v596
    %v598 = vpop.f32.mrf.mxu0
    %v599 = vpop.f32.mrf.mxu0
    %v600 = vadd.f32 0.0, %v599
    %v601 = vpop.f32.mrf.mxu0
    %602 = vmatprep.mubr.bf16.mxu0 0
    %603 = vmatmul.mubr.bf16.gmra.mxu0 %v283
    %v604 = vpop.f32.mrf.mxu0
    %v605 = vadd.f32 0.0, %v604
    %v606 = vpop.f32.mrf.mxu0
    %v607 = vpop.f32.mrf.mxu0
    %v608 = vadd.f32 0.0, %v607
    %v609 = vpop.f32.mrf.mxu0
    %610 = vmatprep.mubr.bf16.mxu0 0
    %611 = vmatmul.mubr.bf16.gmra.mxu0 %v284
    %v612 = vpop.f32.mrf.mxu0
    %v613 = vadd.f32 0.0, %v612
    %v614 = vpop.f32.mrf.mxu0
    %v615 = vpop.f32.mrf.mxu0
    %v616 = vadd.f32 0.0, %v615
    %v617 = vpop.f32.mrf.mxu0
    %618 = vmatprep.mubr.bf16.mxu0 0
    %619 = vmatmul.mubr.bf16.gmra.mxu0 %v285
    %v620 = vpop.f32.mrf.mxu0
    %v621 = vadd.f32 0.0, %v620
    %v622 = vpop.f32.mrf.mxu0
    %v623 = vpop.f32.mrf.mxu0
    %v624 = vadd.f32 0.0, %v623
    %v625 = vpop.f32.mrf.mxu0
    %626 = vmatprep.mubr.bf16.mxu0 0
    %627 = vmatmul.mubr.bf16.gmra.mxu0 %v286
    %v628 = vpop.f32.mrf.mxu0
    %v629 = vadd.f32 0.0, %v628
    %v630 = vpop.f32.mrf.mxu0
    %v631 = vpop.f32.mrf.mxu0
    %v632 = vadd.f32 0.0, %v631
    %v633 = vpop.f32.mrf.mxu0
    %634 = vmatprep.mubr.bf16.mxu0 0
    %635 = vmatmul.mubr.bf16.gmra.mxu0 %v287
    %v636 = vpop.f32.mrf.mxu0
    %v637 = vadd.f32 0.0, %v636
    %v638 = vpop.f32.mrf.mxu0
    %v639 = vpop.f32.mrf.mxu0
    %v640 = vadd.f32 0.0, %v639
    %v641 = vpop.f32.mrf.mxu0
    %642 = vmatprep.mubr.bf16.mxu0 0
    %643 = vmatmul.mubr.bf16.gmra.mxu0 %v288
    %v644 = vpop.f32.mrf.mxu0
    %v645 = vadd.f32 0.0, %v644
    %v646 = vpop.f32.mrf.mxu0
    %v647 = vpop.f32.mrf.mxu0
    %v648 = vadd.f32 0.0, %v647
    %v649 = vpop.f32.mrf.mxu0
    %650 = vmatprep.mubr.bf16.mxu0 0
    %651 = vmatmul.mubr.bf16.gmra.mxu0 %v289
    %v652 = vpop.f32.mrf.mxu0
    %v653 = vadd.f32 0.0, %v652
    %v654 = vpop.f32.mrf.mxu0
    %v655 = vpop.f32.mrf.mxu0
    %v656 = vadd.f32 0.0, %v655
    %v657 = vpop.f32.mrf.mxu0
    %658 = vdwg.mxu0
    %v659 = vpack.c.bf16 %v408, %v405
    %v660 = vpack.c.bf16 %v416, %v413
    %v661 = vpack.c.bf16 %v424, %v421
    %v662 = vpack.c.bf16 %v432, %v429
    %v663 = vpack.c.bf16 %v440, %v437
    %v664 = vpack.c.bf16 %v448, %v445
    %v665 = vpack.c.bf16 %v456, %v453
    %v666 = vpack.c.bf16 %v464, %v461
    %v667 = vpack.c.bf16 %v472, %v469
    %v668 = vpack.c.bf16 %v480, %v477
    %v669 = vpack.c.bf16 %v488, %v485
    %v670 = vpack.c.bf16 %v496, %v493
    %v671 = vpack.c.bf16 %v504, %v501
    %v672 = vpack.c.bf16 %v512, %v509
    %v673 = vpack.c.bf16 %v520, %v517
    %v674 = vpack.c.bf16 %v528, %v525
    %v675 = vpack.c.bf16 %v536, %v533
    %v676 = vpack.c.bf16 %v544, %v541
    %v677 = vpack.c.bf16 %v552, %v549
    %v678 = vpack.c.bf16 %v560, %v557
    %v679 = vpack.c.bf16 %v568, %v565
    %v680 = vpack.c.bf16 %v576, %v573
    %v681 = vpack.c.bf16 %v584, %v581
    %v682 = vpack.c.bf16 %v592, %v589
    %v683 = vpack.c.bf16 %v600, %v597
    %v684 = vpack.c.bf16 %v608, %v605
    %v685 = vpack.c.bf16 %v616, %v613
    %v686 = vpack.c.bf16 %v624, %v621
    %v687 = vpack.c.bf16 %v632, %v629
    %v688 = vpack.c.bf16 %v640, %v637
    %v689 = vpack.c.bf16 %v648, %v645
    %v690 = vpack.c.bf16 %v656, %v653
    %v723 = vunpack.c.l.b16 %v659
    %v724 = vunpack.c.h.b16 %v659
    %v725 = vunpack.c.l.b16 %v660
    %v726 = vunpack.c.h.b16 %v660
    %v727 = vunpack.c.l.b16 %v661
    %v728 = vunpack.c.h.b16 %v661
    %v729 = vunpack.c.l.b16 %v662
    %v730 = vunpack.c.h.b16 %v662
    %v731 = vunpack.c.l.b16 %v663
    %v732 = vunpack.c.h.b16 %v663
    %v733 = vunpack.c.l.b16 %v664
    %v734 = vunpack.c.h.b16 %v664
    %v735 = vunpack.c.l.b16 %v665
    %v736 = vunpack.c.h.b16 %v665
    %v737 = vunpack.c.l.b16 %v666
    %v738 = vunpack.c.h.b16 %v666
    %v739 = vunpack.c.l.b16 %v667
    %v740 = vunpack.c.h.b16 %v667
    %v741 = vunpack.c.l.b16 %v668
    %v742 = vunpack.c.h.b16 %v668
    %v743 = vunpack.c.l.b16 %v669
    %v744 = vunpack.c.h.b16 %v669
    %v745 = vunpack.c.l.b16 %v670
    %v746 = vunpack.c.h.b16 %v670
    %v747 = vunpack.c.l.b16 %v671
    %v748 = vunpack.c.h.b16 %v671
    %v749 = vunpack.c.l.b16 %v672
    %v750 = vunpack.c.h.b16 %v672
    %v751 = vunpack.c.l.b16 %v673
    %v752 = vunpack.c.h.b16 %v673
    %v753 = vunpack.c.l.b16 %v674
    %v754 = vunpack.c.h.b16 %v674
    %v755 = vunpack.c.l.b16 %v675
    %v756 = vunpack.c.h.b16 %v675
    %v757 = vunpack.c.l.b16 %v676
    %v758 = vunpack.c.h.b16 %v676
    %v759 = vunpack.c.l.b16 %v677
    %v760 = vunpack.c.h.b16 %v677
    %v761 = vunpack.c.l.b16 %v678
    %v762 = vunpack.c.h.b16 %v678
    %v763 = vunpack.c.l.b16 %v679
    %v764 = vunpack.c.h.b16 %v679
    %v765 = vunpack.c.l.b16 %v680
    %v766 = vunpack.c.h.b16 %v680
    %v767 = vunpack.c.l.b16 %v681
    %v768 = vunpack.c.h.b16 %v681
    %v769 = vunpack.c.l.b16 %v682
    %v770 = vunpack.c.h.b16 %v682
    %v771 = vunpack.c.l.b16 %v683
    %v772 = vunpack.c.h.b16 %v683
    %v773 = vunpack.c.l.b16 %v684
    %v774 = vunpack.c.h.b16 %v684
    %v775 = vunpack.c.l.b16 %v685
    %v776 = vunpack.c.h.b16 %v685
    %v777 = vunpack.c.l.b16 %v686
    %v778 = vunpack.c.h.b16 %v686
    %v779 = vunpack.c.l.b16 %v687
    %v780 = vunpack.c.h.b16 %v687
    %v781 = vunpack.c.l.b16 %v688
    %v782 = vunpack.c.h.b16 %v688
    %v783 = vunpack.c.l.b16 %v689
    %v784 = vunpack.c.h.b16 %v689
    %v785 = vunpack.c.l.b16 %v690
    %v786 = vunpack.c.h.b16 %v690
    %v787 = vpack.c.b16 %v723, %v723
    %v788 = vpack.c.b16 %v724, %v724
    %v789 = vpack.c.b16 %v725, %v725
    %v790 = vpack.c.b16 %v726, %v726
    %v791 = vpack.c.b16 %v727, %v727
    %v792 = vpack.c.b16 %v728, %v728
    %v793 = vpack.c.b16 %v729, %v729
    %v794 = vpack.c.b16 %v730, %v730
    %v795 = vpack.c.b16 %v731, %v731
    %v796 = vpack.c.b16 %v732, %v732
    %v797 = vpack.c.b16 %v733, %v733
    %v798 = vpack.c.b16 %v734, %v734
    %v799 = vpack.c.b16 %v735, %v735
    %v800 = vpack.c.b16 %v736, %v736
    %v801 = vpack.c.b16 %v737, %v737
    %v802 = vpack.c.b16 %v738, %v738
    %v803 = vpack.c.b16 %v739, %v739
    %v804 = vpack.c.b16 %v740, %v740
    %v805 = vpack.c.b16 %v741, %v741
    %v806 = vpack.c.b16 %v742, %v742
    %v807 = vpack.c.b16 %v743, %v743
    %v808 = vpack.c.b16 %v744, %v744
    %v809 = vpack.c.b16 %v745, %v745
    %v810 = vpack.c.b16 %v746, %v746
    %v811 = vpack.c.b16 %v747, %v747
    %v812 = vpack.c.b16 %v748, %v748
    %v813 = vpack.c.b16 %v749, %v749
    %v814 = vpack.c.b16 %v750, %v750
    %v815 = vpack.c.b16 %v751, %v751
    %v816 = vpack.c.b16 %v752, %v752
    %v817 = vpack.c.b16 %v753, %v753
    %v818 = vpack.c.b16 %v754, %v754
    %v819 = vpack.c.b16 %v755, %v755
    %v820 = vpack.c.b16 %v756, %v756
    %v821 = vpack.c.b16 %v757, %v757
    %v822 = vpack.c.b16 %v758, %v758
    %v823 = vpack.c.b16 %v759, %v759
    %v824 = vpack.c.b16 %v760, %v760
    %v825 = vpack.c.b16 %v761, %v761
    %v826 = vpack.c.b16 %v762, %v762
    %v827 = vpack.c.b16 %v763, %v763
    %v828 = vpack.c.b16 %v764, %v764
    %v829 = vpack.c.b16 %v765, %v765
    %v830 = vpack.c.b16 %v766, %v766
    %v831 = vpack.c.b16 %v767, %v767
    %v832 = vpack.c.b16 %v768, %v768
    %v833 = vpack.c.b16 %v769, %v769
    %v834 = vpack.c.b16 %v770, %v770
    %v835 = vpack.c.b16 %v771, %v771
    %v836 = vpack.c.b16 %v772, %v772
    %v837 = vpack.c.b16 %v773, %v773
    %v838 = vpack.c.b16 %v774, %v774
    %v839 = vpack.c.b16 %v775, %v775
    %v840 = vpack.c.b16 %v776, %v776
    %v841 = vpack.c.b16 %v777, %v777
    %v842 = vpack.c.b16 %v778, %v778
    %v843 = vpack.c.b16 %v779, %v779
    %v844 = vpack.c.b16 %v780, %v780
    %v845 = vpack.c.b16 %v781, %v781
    %v846 = vpack.c.b16 %v782, %v782
    %v847 = vpack.c.b16 %v783, %v783
    %v848 = vpack.c.b16 %v784, %v784
    %v849 = vpack.c.b16 %v785, %v785
    %v850 = vpack.c.b16 %v786, %v786
    %915 = vst [vmem:[#allocation7] sm:$0xf] %v787
    %916 = vst [vmem:[#allocation7 + $0x4] sm:$0xf] %v788
    %917 = vst [vmem:[#allocation7 + $0x8] sm:$0xf] %v789
    %918 = vst [vmem:[#allocation7 + $0xc] sm:$0xf] %v790
    %919 = vst [vmem:[#allocation7 + $0x10] sm:$0xf] %v791
    %920 = vst [vmem:[#allocation7 + $0x14] sm:$0xf] %v792
    %921 = vst [vmem:[#allocation7 + $0x18] sm:$0xf] %v793
    %922 = vst [vmem:[#allocation7 + $0x1c] sm:$0xf] %v794
    %923 = vst [vmem:[#allocation7 + $0x20] sm:$0xf] %v795
    %924 = vst [vmem:[#allocation7 + $0x24] sm:$0xf] %v796
    %925 = vst [vmem:[#allocation7 + $0x28] sm:$0xf] %v797
    %926 = vst [vmem:[#allocation7 + $0x2c] sm:$0xf] %v798
    %927 = vst [vmem:[#allocation7 + $0x30] sm:$0xf] %v799
    %928 = vst [vmem:[#allocation7 + $0x34] sm:$0xf] %v800
    %929 = vst [vmem:[#allocation7 + $0x38] sm:$0xf] %v801
    %930 = vst [vmem:[#allocation7 + $0x3c] sm:$0xf] %v802
    %931 = vst [vmem:[#allocation7 + $0x40] sm:$0xf] %v803
    %932 = vst [vmem:[#allocation7 + $0x44] sm:$0xf] %v804
    %933 = vst [vmem:[#allocation7 + $0x48] sm:$0xf] %v805
    %934 = vst [vmem:[#allocation7 + $0x4c] sm:$0xf] %v806
    %935 = vst [vmem:[#allocation7 + $0x50] sm:$0xf] %v807
    %936 = vst [vmem:[#allocation7 + $0x54] sm:$0xf] %v808
    %937 = vst [vmem:[#allocation7 + $0x58] sm:$0xf] %v809
    %938 = vst [vmem:[#allocation7 + $0x5c] sm:$0xf] %v810
    %939 = vst [vmem:[#allocation7 + $0x60] sm:$0xf] %v811
    %940 = vst [vmem:[#allocation7 + $0x64] sm:$0xf] %v812
    %941 = vst [vmem:[#allocation7 + $0x68] sm:$0xf] %v813
    %942 = vst [vmem:[#allocation7 + $0x6c] sm:$0xf] %v814
    %943 = vst [vmem:[#allocation7 + $0x70] sm:$0xf] %v815
    %944 = vst [vmem:[#allocation7 + $0x74] sm:$0xf] %v816
    %945 = vst [vmem:[#allocation7 + $0x78] sm:$0xf] %v817
    %946 = vst [vmem:[#allocation7 + $0x7c] sm:$0xf] %v818
    %947 = vst [vmem:[#allocation7 + $0x80] sm:$0xf] %v819
    %948 = vst [vmem:[#allocation7 + $0x84] sm:$0xf] %v820
    %949 = vst [vmem:[#allocation7 + $0x88] sm:$0xf] %v821
    %950 = vst [vmem:[#allocation7 + $0x8c] sm:$0xf] %v822
    %951 = vst [vmem:[#allocation7 + $0x90] sm:$0xf] %v823
    %952 = vst [vmem:[#allocation7 + $0x94] sm:$0xf] %v824
    %953 = vst [vmem:[#allocation7 + $0x98] sm:$0xf] %v825
    %954 = vst [vmem:[#allocation7 + $0x9c] sm:$0xf] %v826
    %955 = vst [vmem:[#allocation7 + $0xa0] sm:$0xf] %v827
    %956 = vst [vmem:[#allocation7 + $0xa4] sm:$0xf] %v828
    %957 = vst [vmem:[#allocation7 + $0xa8] sm:$0xf] %v829
    %958 = vst [vmem:[#allocation7 + $0xac] sm:$0xf] %v830
    %959 = vst [vmem:[#allocation7 + $0xb0] sm:$0xf] %v831
    %960 = vst [vmem:[#allocation7 + $0xb4] sm:$0xf] %v832
    %961 = vst [vmem:[#allocation7 + $0xb8] sm:$0xf] %v833
    %962 = vst [vmem:[#allocation7 + $0xbc] sm:$0xf] %v834
    %963 = vst [vmem:[#allocation7 + $0xc0] sm:$0xf] %v835
    %964 = vst [vmem:[#allocation7 + $0xc4] sm:$0xf] %v836
    %965 = vst [vmem:[#allocation7 + $0xc8] sm:$0xf] %v837
    %966 = vst [vmem:[#allocation7 + $0xcc] sm:$0xf] %v838
    %967 = vst [vmem:[#allocation7 + $0xd0] sm:$0xf] %v839
    %968 = vst [vmem:[#allocation7 + $0xd4] sm:$0xf] %v840
    %969 = vst [vmem:[#allocation7 + $0xd8] sm:$0xf] %v841
    %970 = vst [vmem:[#allocation7 + $0xdc] sm:$0xf] %v842
    %971 = vst [vmem:[#allocation7 + $0xe0] sm:$0xf] %v843
    %972 = vst [vmem:[#allocation7 + $0xe4] sm:$0xf] %v844
    %973 = vst [vmem:[#allocation7 + $0xe8] sm:$0xf] %v845
    %974 = vst [vmem:[#allocation7 + $0xec] sm:$0xf] %v846
    %975 = vst [vmem:[#allocation7 + $0xf0] sm:$0xf] %v847
    %976 = vst [vmem:[#allocation7 + $0xf4] sm:$0xf] %v848
    %977 = vst [vmem:[#allocation7 + $0xf8] sm:$0xf] %v849
    %978 = vst [vmem:[#allocation7 + $0xfc] sm:$0xf] %v850
    %v979 = vld [vmem:[%s2] sm:$0x1]
    %v981 = vlaneseq
    %v982 = vshrl.u32 %v981, 7
    %v983 = vsub.s32 0, %v982
    %v984 = vrot.slane %v979, %v983
    %v986 = vmul.f32 %v405, %v984
    %v987 = vmul.f32 %v408, %v984
    %v988 = vmul.f32 %v413, %v984
    %v989 = vmul.f32 %v416, %v984
    %v990 = vmul.f32 %v421, %v984
    %v991 = vmul.f32 %v424, %v984
    %v992 = vmul.f32 %v429, %v984
    %v993 = vmul.f32 %v432, %v984
    %v994 = vmul.f32 %v437, %v984
    %v995 = vmul.f32 %v440, %v984
    %v996 = vmul.f32 %v445, %v984
    %v997 = vmul.f32 %v448, %v984
    %v998 = vmul.f32 %v453, %v984
    %v999 = vmul.f32 %v456, %v984
    %v1000 = vmul.f32 %v461, %v984
    %v1001 = vmul.f32 %v464, %v984
    %v1002 = vmul.f32 %v469, %v984
    %v1003 = vmul.f32 %v472, %v984
    %v1004 = vmul.f32 %v477, %v984
    %v1005 = vmul.f32 %v480, %v984
    %v1006 = vmul.f32 %v485, %v984
    %v1007 = vmul.f32 %v488, %v984
    %v1008 = vmul.f32 %v493, %v984
    %v1009 = vmul.f32 %v496, %v984
    %v1010 = vmul.f32 %v501, %v984
    %v1011 = vmul.f32 %v504, %v984
    %v1012 = vmul.f32 %v509, %v984
    %v1013 = vmul.f32 %v512, %v984
    %v1014 = vmul.f32 %v517, %v984
    %v1015 = vmul.f32 %v520, %v984
    %v1016 = vmul.f32 %v525, %v984
    %v1017 = vmul.f32 %v528, %v984
    %v1018 = vmul.f32 %v533, %v984
    %v1019 = vmul.f32 %v536, %v984
    %v1020 = vmul.f32 %v541, %v984
    %v1021 = vmul.f32 %v544, %v984
    %v1022 = vmul.f32 %v549, %v984
    %v1023 = vmul.f32 %v552, %v984
    %v1024 = vmul.f32 %v557, %v984
    %v1025 = vmul.f32 %v560, %v984
    %v1026 = vmul.f32 %v565, %v984
    %v1027 = vmul.f32 %v568, %v984
    %v1028 = vmul.f32 %v573, %v984
    %v1029 = vmul.f32 %v576, %v984
    %v1030 = vmul.f32 %v581, %v984
    %v1031 = vmul.f32 %v584, %v984
    %v1032 = vmul.f32 %v589, %v984
    %v1033 = vmul.f32 %v592, %v984
    %v1034 = vmul.f32 %v597, %v984
    %v1035 = vmul.f32 %v600, %v984
    %v1036 = vmul.f32 %v605, %v984
    %v1037 = vmul.f32 %v608, %v984
    %v1038 = vmul.f32 %v613, %v984
    %v1039 = vmul.f32 %v616, %v984
    %v1040 = vmul.f32 %v621, %v984
    %v1041 = vmul.f32 %v624, %v984
    %v1042 = vmul.f32 %v629, %v984
    %v1043 = vmul.f32 %v632, %v984
    %v1044 = vmul.f32 %v637, %v984
    %v1045 = vmul.f32 %v640, %v984
    %v1046 = vmul.f32 %v645, %v984
    %v1047 = vmul.f32 %v648, %v984
    %v1048 = vmul.f32 %v653, %v984
    %v1049 = vmul.f32 %v656, %v984
    %1050 = vadd.xlane.f32.xlu0 %v986
    %v1051 = vpop.xlane.xlu0 %1050
    %1052 = vadd.xlane.f32.xlu0 %v987
    %v1053 = vpop.xlane.xlu0 %1052
    %1054 = vadd.xlane.f32.xlu0 %v988
    %v1055 = vpop.xlane.xlu0 %1054
    %1056 = vadd.xlane.f32.xlu0 %v989
    %v1057 = vpop.xlane.xlu0 %1056
    %1058 = vadd.xlane.f32.xlu0 %v990
    %v1059 = vpop.xlane.xlu0 %1058
    %1060 = vadd.xlane.f32.xlu0 %v991
    %v1061 = vpop.xlane.xlu0 %1060
    %1062 = vadd.xlane.f32.xlu0 %v992
    %v1063 = vpop.xlane.xlu0 %1062
    %1064 = vadd.xlane.f32.xlu0 %v993
    %v1065 = vpop.xlane.xlu0 %1064
    %1066 = vadd.xlane.f32.xlu0 %v994
    %v1067 = vpop.xlane.xlu0 %1066
    %1068 = vadd.xlane.f32.xlu0 %v995
    %v1069 = vpop.xlane.xlu0 %1068
    %1070 = vadd.xlane.f32.xlu0 %v996
    %v1071 = vpop.xlane.xlu0 %1070
    %1072 = vadd.xlane.f32.xlu0 %v997
    %v1073 = vpop.xlane.xlu0 %1072
    %1074 = vadd.xlane.f32.xlu0 %v998
    %v1075 = vpop.xlane.xlu0 %1074
    %1076 = vadd.xlane.f32.xlu0 %v999
    %v1077 = vpop.xlane.xlu0 %1076
    %1078 = vadd.xlane.f32.xlu0 %v1000
    %v1079 = vpop.xlane.xlu0 %1078
    %1080 = vadd.xlane.f32.xlu0 %v1001
    %v1081 = vpop.xlane.xlu0 %1080
    %1082 = vadd.xlane.f32.xlu0 %v1002
    %v1083 = vpop.xlane.xlu0 %1082
    %1084 = vadd.xlane.f32.xlu0 %v1003
    %v1085 = vpop.xlane.xlu0 %1084
    %1086 = vadd.xlane.f32.xlu0 %v1004
    %v1087 = vpop.xlane.xlu0 %1086
    %1088 = vadd.xlane.f32.xlu0 %v1005
    %v1089 = vpop.xlane.xlu0 %1088
    %1090 = vadd.xlane.f32.xlu0 %v1006
    %v1091 = vpop.xlane.xlu0 %1090
    %1092 = vadd.xlane.f32.xlu0 %v1007
    %v1093 = vpop.xlane.xlu0 %1092
    %1094 = vadd.xlane.f32.xlu0 %v1008
    %v1095 = vpop.xlane.xlu0 %1094
    %1096 = vadd.xlane.f32.xlu0 %v1009
    %v1097 = vpop.xlane.xlu0 %1096
    %1098 = vadd.xlane.f32.xlu0 %v1010
    %v1099 = vpop.xlane.xlu0 %1098
    %1100 = vadd.xlane.f32.xlu0 %v1011
    %v1101 = vpop.xlane.xlu0 %1100
    %1102 = vadd.xlane.f32.xlu0 %v1012
    %v1103 = vpop.xlane.xlu0 %1102
    %1104 = vadd.xlane.f32.xlu0 %v1013
    %v1105 = vpop.xlane.xlu0 %1104
    %1106 = vadd.xlane.f32.xlu0 %v1014
    %v1107 = vpop.xlane.xlu0 %1106
    %1108 = vadd.xlane.f32.xlu0 %v1015
    %v1109 = vpop.xlane.xlu0 %1108
    %1110 = vadd.xlane.f32.xlu0 %v1016
    %v1111 = vpop.xlane.xlu0 %1110
    %1112 = vadd.xlane.f32.xlu0 %v1017
    %v1113 = vpop.xlane.xlu0 %1112
    %1114 = vadd.xlane.f32.xlu0 %v1018
    %v1115 = vpop.xlane.xlu0 %1114
    %1116 = vadd.xlane.f32.xlu0 %v1019
    %v1117 = vpop.xlane.xlu0 %1116
    %1118 = vadd.xlane.f32.xlu0 %v1020
    %v1119 = vpop.xlane.xlu0 %1118
    %1120 = vadd.xlane.f32.xlu0 %v1021
    %v1121 = vpop.xlane.xlu0 %1120
    %1122 = vadd.xlane.f32.xlu0 %v1022
    %v1123 = vpop.xlane.xlu0 %1122
    %1124 = vadd.xlane.f32.xlu0 %v1023
    %v1125 = vpop.xlane.xlu0 %1124
    %1126 = vadd.xlane.f32.xlu0 %v1024
    %v1127 = vpop.xlane.xlu0 %1126
    %1128 = vadd.xlane.f32.xlu0 %v1025
    %v1129 = vpop.xlane.xlu0 %1128
    %1130 = vadd.xlane.f32.xlu0 %v1026
    %v1131 = vpop.xlane.xlu0 %1130
    %1132 = vadd.xlane.f32.xlu0 %v1027
    %v1133 = vpop.xlane.xlu0 %1132
    %1134 = vadd.xlane.f32.xlu0 %v1028
    %v1135 = vpop.xlane.xlu0 %1134
    %1136 = vadd.xlane.f32.xlu0 %v1029
    %v1137 = vpop.xlane.xlu0 %1136
    %1138 = vadd.xlane.f32.xlu0 %v1030
    %v1139 = vpop.xlane.xlu0 %1138
    %1140 = vadd.xlane.f32.xlu0 %v1031
    %v1141 = vpop.xlane.xlu0 %1140
    %1142 = vadd.xlane.f32.xlu0 %v1032
    %v1143 = vpop.xlane.xlu0 %1142
    %1144 = vadd.xlane.f32.xlu0 %v1033
    %v1145 = vpop.xlane.xlu0 %1144
    %1146 = vadd.xlane.f32.xlu0 %v1034
    %v1147 = vpop.xlane.xlu0 %1146
    %1148 = vadd.xlane.f32.xlu0 %v1035
    %v1149 = vpop.xlane.xlu0 %1148
    %1150 = vadd.xlane.f32.xlu0 %v1036
    %v1151 = vpop.xlane.xlu0 %1150
    %1152 = vadd.xlane.f32.xlu0 %v1037
    %v1153 = vpop.xlane.xlu0 %1152
    %1154 = vadd.xlane.f32.xlu0 %v1038
    %v1155 = vpop.xlane.xlu0 %1154
    %1156 = vadd.xlane.f32.xlu0 %v1039
    %v1157 = vpop.xlane.xlu0 %1156
    %1158 = vadd.xlane.f32.xlu0 %v1040
    %v1159 = vpop.xlane.xlu0 %1158
    %1160 = vadd.xlane.f32.xlu0 %v1041
    %v1161 = vpop.xlane.xlu0 %1160
    %1162 = vadd.xlane.f32.xlu0 %v1042
    %v1163 = vpop.xlane.xlu0 %1162
    %1164 = vadd.xlane.f32.xlu0 %v1043
    %v1165 = vpop.xlane.xlu0 %1164
    %1166 = vadd.xlane.f32.xlu0 %v1044
    %v1167 = vpop.xlane.xlu0 %1166
    %1168 = vadd.xlane.f32.xlu0 %v1045
    %v1169 = vpop.xlane.xlu0 %1168
    %1170 = vadd.xlane.f32.xlu0 %v1046
    %v1171 = vpop.xlane.xlu0 %1170
    %1172 = vadd.xlane.f32.xlu0 %v1047
    %v1173 = vpop.xlane.xlu0 %1172
    %1174 = vadd.xlane.f32.xlu0 %v1048
    %v1175 = vpop.xlane.xlu0 %1174
    %1176 = vadd.xlane.f32.xlu0 %v1049
    %v1177 = vpop.xlane.xlu0 %1176
    %vm1178 = vcmask 7168
    %1179 = vst.msk [vmem:[%s5] sm:$0xff] %vm1178, %v1051
    %1180 = vst.msk [vmem:[%s5 + $0x8] sm:$0xff] %vm1178, %v1053
    %1181 = vst.msk [vmem:[%s5 + $0x10] sm:$0xff] %vm1178, %v1055
    %1182 = vst.msk [vmem:[%s5 + $0x18] sm:$0xff] %vm1178, %v1057
    %1183 = vst.msk [vmem:[%s5 + $0x20] sm:$0xff] %vm1178, %v1059
    %1184 = vst.msk [vmem:[%s5 + $0x28] sm:$0xff] %vm1178, %v1061
    %1185 = vst.msk [vmem:[%s5 + $0x30] sm:$0xff] %vm1178, %v1063
    %1186 = vst.msk [vmem:[%s5 + $0x38] sm:$0xff] %vm1178, %v1065
    %1187 = vst.msk [vmem:[%s5 + $0x40] sm:$0xff] %vm1178, %v1067
    %1188 = vst.msk [vmem:[%s5 + $0x48] sm:$0xff] %vm1178, %v1069
    %1189 = vst.msk [vmem:[%s5 + $0x50] sm:$0xff] %vm1178, %v1071
    %1190 = vst.msk [vmem:[%s5 + $0x58] sm:$0xff] %vm1178, %v1073
    %1191 = vst.msk [vmem:[%s5 + $0x60] sm:$0xff] %vm1178, %v1075
    %1192 = vst.msk [vmem:[%s5 + $0x68] sm:$0xff] %vm1178, %v1077
    %1193 = vst.msk [vmem:[%s5 + $0x70] sm:$0xff] %vm1178, %v1079
    %1194 = vst.msk [vmem:[%s5 + $0x78] sm:$0xff] %vm1178, %v1081
    %1195 = vst.msk [vmem:[%s5 + $0x80] sm:$0xff] %vm1178, %v1083
    %1196 = vst.msk [vmem:[%s5 + $0x88] sm:$0xff] %vm1178, %v1085
    %1197 = vst.msk [vmem:[%s5 + $0x90] sm:$0xff] %vm1178, %v1087
    %1198 = vst.msk [vmem:[%s5 + $0x98] sm:$0xff] %vm1178, %v1089
    %1199 = vst.msk [vmem:[%s5 + $0xa0] sm:$0xff] %vm1178, %v1091
    %1200 = vst.msk [vmem:[%s5 + $0xa8] sm:$0xff] %vm1178, %v1093
    %1201 = vst.msk [vmem:[%s5 + $0xb0] sm:$0xff] %vm1178, %v1095
    %1202 = vst.msk [vmem:[%s5 + $0xb8] sm:$0xff] %vm1178, %v1097
    %1203 = vst.msk [vmem:[%s5 + $0xc0] sm:$0xff] %vm1178, %v1099
    %1204 = vst.msk [vmem:[%s5 + $0xc8] sm:$0xff] %vm1178, %v1101
    %1205 = vst.msk [vmem:[%s5 + $0xd0] sm:$0xff] %vm1178, %v1103
    %1206 = vst.msk [vmem:[%s5 + $0xd8] sm:$0xff] %vm1178, %v1105
    %1207 = vst.msk [vmem:[%s5 + $0xe0] sm:$0xff] %vm1178, %v1107
    %1208 = vst.msk [vmem:[%s5 + $0xe8] sm:$0xff] %vm1178, %v1109
    %1209 = vst.msk [vmem:[%s5 + $0xf0] sm:$0xff] %vm1178, %v1111
    %1210 = vst.msk [vmem:[%s5 + $0xf8] sm:$0xff] %vm1178, %v1113
    %1211 = vst.msk [vmem:[%s5 + $0x100] sm:$0xff] %vm1178, %v1115
    %1212 = vst.msk [vmem:[%s5 + $0x108] sm:$0xff] %vm1178, %v1117
    %1213 = vst.msk [vmem:[%s5 + $0x110] sm:$0xff] %vm1178, %v1119
    %1214 = vst.msk [vmem:[%s5 + $0x118] sm:$0xff] %vm1178, %v1121
    %1215 = vst.msk [vmem:[%s5 + $0x120] sm:$0xff] %vm1178, %v1123
    %1216 = vst.msk [vmem:[%s5 + $0x128] sm:$0xff] %vm1178, %v1125
    %1217 = vst.msk [vmem:[%s5 + $0x130] sm:$0xff] %vm1178, %v1127
    %1218 = vst.msk [vmem:[%s5 + $0x138] sm:$0xff] %vm1178, %v1129
    %1219 = vst.msk [vmem:[%s5 + $0x140] sm:$0xff] %vm1178, %v1131
    %1220 = vst.msk [vmem:[%s5 + $0x148] sm:$0xff] %vm1178, %v1133
    %1221 = vst.msk [vmem:[%s5 + $0x150] sm:$0xff] %vm1178, %v1135
    %1222 = vst.msk [vmem:[%s5 + $0x158] sm:$0xff] %vm1178, %v1137
    %1223 = vst.msk [vmem:[%s5 + $0x160] sm:$0xff] %vm1178, %v1139
    %1224 = vst.msk [vmem:[%s5 + $0x168] sm:$0xff] %vm1178, %v1141
    %1225 = vst.msk [vmem:[%s5 + $0x170] sm:$0xff] %vm1178, %v1143
    %1226 = vst.msk [vmem:[%s5 + $0x178] sm:$0xff] %vm1178, %v1145
    %1227 = vst.msk [vmem:[%s5 + $0x180] sm:$0xff] %vm1178, %v1147
    %1228 = vst.msk [vmem:[%s5 + $0x188] sm:$0xff] %vm1178, %v1149
    %1229 = vst.msk [vmem:[%s5 + $0x190] sm:$0xff] %vm1178, %v1151
    %1230 = vst.msk [vmem:[%s5 + $0x198] sm:$0xff] %vm1178, %v1153
    %1231 = vst.msk [vmem:[%s5 + $0x1a0] sm:$0xff] %vm1178, %v1155
    %1232 = vst.msk [vmem:[%s5 + $0x1a8] sm:$0xff] %vm1178, %v1157
    %1233 = vst.msk [vmem:[%s5 + $0x1b0] sm:$0xff] %vm1178, %v1159
    %1234 = vst.msk [vmem:[%s5 + $0x1b8] sm:$0xff] %vm1178, %v1161
    %1235 = vst.msk [vmem:[%s5 + $0x1c0] sm:$0xff] %vm1178, %v1163
    %1236 = vst.msk [vmem:[%s5 + $0x1c8] sm:$0xff] %vm1178, %v1165
    %1237 = vst.msk [vmem:[%s5 + $0x1d0] sm:$0xff] %vm1178, %v1167
    %1238 = vst.msk [vmem:[%s5 + $0x1d8] sm:$0xff] %vm1178, %v1169
    %1239 = vst.msk [vmem:[%s5 + $0x1e0] sm:$0xff] %vm1178, %v1171
    %1240 = vst.msk [vmem:[%s5 + $0x1e8] sm:$0xff] %vm1178, %v1173
    %1241 = vst.msk [vmem:[%s5 + $0x1f0] sm:$0xff] %vm1178, %v1175
    %1242 = vst.msk [vmem:[%s5 + $0x1f8] sm:$0xff] %vm1178, %v1177
    %v1243 = vld [vmem:[%s3] sm:$0x1]
    %v1245 = vlaneseq
    %v1246 = vshrl.u32 %v1245, 7
    %v1247 = vsub.s32 0, %v1246
    %v1248 = vrot.slane %v1243, %v1247
    %v1250 = vmul.f32 %v405, %v1248
    %v1251 = vmul.f32 %v408, %v1248
    %v1252 = vmul.f32 %v413, %v1248
    %v1253 = vmul.f32 %v416, %v1248
    %v1254 = vmul.f32 %v421, %v1248
    %v1255 = vmul.f32 %v424, %v1248
    %v1256 = vmul.f32 %v429, %v1248
    %v1257 = vmul.f32 %v432, %v1248
    %v1258 = vmul.f32 %v437, %v1248
    %v1259 = vmul.f32 %v440, %v1248
    %v1260 = vmul.f32 %v445, %v1248
    %v1261 = vmul.f32 %v448, %v1248
    %v1262 = vmul.f32 %v453, %v1248
    %v1263 = vmul.f32 %v456, %v1248
    %v1264 = vmul.f32 %v461, %v1248
    %v1265 = vmul.f32 %v464, %v1248
    %v1266 = vmul.f32 %v469, %v1248
    %v1267 = vmul.f32 %v472, %v1248
    %v1268 = vmul.f32 %v477, %v1248
    %v1269 = vmul.f32 %v480, %v1248
    %v1270 = vmul.f32 %v485, %v1248
    %v1271 = vmul.f32 %v488, %v1248
    %v1272 = vmul.f32 %v493, %v1248
    %v1273 = vmul.f32 %v496, %v1248
    %v1274 = vmul.f32 %v501, %v1248
    %v1275 = vmul.f32 %v504, %v1248
    %v1276 = vmul.f32 %v509, %v1248
    %v1277 = vmul.f32 %v512, %v1248
    %v1278 = vmul.f32 %v517, %v1248
    %v1279 = vmul.f32 %v520, %v1248
    %v1280 = vmul.f32 %v525, %v1248
    %v1281 = vmul.f32 %v528, %v1248
    %v1282 = vmul.f32 %v533, %v1248
    %v1283 = vmul.f32 %v536, %v1248
    %v1284 = vmul.f32 %v541, %v1248
    %v1285 = vmul.f32 %v544, %v1248
    %v1286 = vmul.f32 %v549, %v1248
    %v1287 = vmul.f32 %v552, %v1248
    %v1288 = vmul.f32 %v557, %v1248
    %v1289 = vmul.f32 %v560, %v1248
    %v1290 = vmul.f32 %v565, %v1248
    %v1291 = vmul.f32 %v568, %v1248
    %v1292 = vmul.f32 %v573, %v1248
    %v1293 = vmul.f32 %v576, %v1248
    %v1294 = vmul.f32 %v581, %v1248
    %v1295 = vmul.f32 %v584, %v1248
    %v1296 = vmul.f32 %v589, %v1248
    %v1297 = vmul.f32 %v592, %v1248
    %v1298 = vmul.f32 %v597, %v1248
    %v1299 = vmul.f32 %v600, %v1248
    %v1300 = vmul.f32 %v605, %v1248
    %v1301 = vmul.f32 %v608, %v1248
    %v1302 = vmul.f32 %v613, %v1248
    %v1303 = vmul.f32 %v616, %v1248
    %v1304 = vmul.f32 %v621, %v1248
    %v1305 = vmul.f32 %v624, %v1248
    %v1306 = vmul.f32 %v629, %v1248
    %v1307 = vmul.f32 %v632, %v1248
    %v1308 = vmul.f32 %v637, %v1248
    %v1309 = vmul.f32 %v640, %v1248
    %v1310 = vmul.f32 %v645, %v1248
    %v1311 = vmul.f32 %v648, %v1248
    %v1312 = vmul.f32 %v653, %v1248
    %v1313 = vmul.f32 %v656, %v1248
    %1314 = vadd.xlane.f32.xlu0 %v1250
    %v1315 = vpop.xlane.xlu0 %1314
    %1316 = vadd.xlane.f32.xlu0 %v1251
    %v1317 = vpop.xlane.xlu0 %1316
    %1318 = vadd.xlane.f32.xlu0 %v1252
    %v1319 = vpop.xlane.xlu0 %1318
    %1320 = vadd.xlane.f32.xlu0 %v1253
    %v1321 = vpop.xlane.xlu0 %1320
    %1322 = vadd.xlane.f32.xlu0 %v1254
    %v1323 = vpop.xlane.xlu0 %1322
    %1324 = vadd.xlane.f32.xlu0 %v1255
    %v1325 = vpop.xlane.xlu0 %1324
    %1326 = vadd.xlane.f32.xlu0 %v1256
    %v1327 = vpop.xlane.xlu0 %1326
    %1328 = vadd.xlane.f32.xlu0 %v1257
    %v1329 = vpop.xlane.xlu0 %1328
    %1330 = vadd.xlane.f32.xlu0 %v1258
    %v1331 = vpop.xlane.xlu0 %1330
    %1332 = vadd.xlane.f32.xlu0 %v1259
    %v1333 = vpop.xlane.xlu0 %1332
    %1334 = vadd.xlane.f32.xlu0 %v1260
    %v1335 = vpop.xlane.xlu0 %1334
    %1336 = vadd.xlane.f32.xlu0 %v1261
    %v1337 = vpop.xlane.xlu0 %1336
    %1338 = vadd.xlane.f32.xlu0 %v1262
    %v1339 = vpop.xlane.xlu0 %1338
    %1340 = vadd.xlane.f32.xlu0 %v1263
    %v1341 = vpop.xlane.xlu0 %1340
    %1342 = vadd.xlane.f32.xlu0 %v1264
    %v1343 = vpop.xlane.xlu0 %1342
    %1344 = vadd.xlane.f32.xlu0 %v1265
    %v1345 = vpop.xlane.xlu0 %1344
    %1346 = vadd.xlane.f32.xlu0 %v1266
    %v1347 = vpop.xlane.xlu0 %1346
    %1348 = vadd.xlane.f32.xlu0 %v1267
    %v1349 = vpop.xlane.xlu0 %1348
    %1350 = vadd.xlane.f32.xlu0 %v1268
    %v1351 = vpop.xlane.xlu0 %1350
    %1352 = vadd.xlane.f32.xlu0 %v1269
    %v1353 = vpop.xlane.xlu0 %1352
    %1354 = vadd.xlane.f32.xlu0 %v1270
    %v1355 = vpop.xlane.xlu0 %1354
    %1356 = vadd.xlane.f32.xlu0 %v1271
    %v1357 = vpop.xlane.xlu0 %1356
    %1358 = vadd.xlane.f32.xlu0 %v1272
    %v1359 = vpop.xlane.xlu0 %1358
    %1360 = vadd.xlane.f32.xlu0 %v1273
    %v1361 = vpop.xlane.xlu0 %1360
    %1362 = vadd.xlane.f32.xlu0 %v1274
    %v1363 = vpop.xlane.xlu0 %1362
    %1364 = vadd.xlane.f32.xlu0 %v1275
    %v1365 = vpop.xlane.xlu0 %1364
    %1366 = vadd.xlane.f32.xlu0 %v1276
    %v1367 = vpop.xlane.xlu0 %1366
    %1368 = vadd.xlane.f32.xlu0 %v1277
    %v1369 = vpop.xlane.xlu0 %1368
    %1370 = vadd.xlane.f32.xlu0 %v1278
    %v1371 = vpop.xlane.xlu0 %1370
    %1372 = vadd.xlane.f32.xlu0 %v1279
    %v1373 = vpop.xlane.xlu0 %1372
    %1374 = vadd.xlane.f32.xlu0 %v1280
    %v1375 = vpop.xlane.xlu0 %1374
    %1376 = vadd.xlane.f32.xlu0 %v1281
    %v1377 = vpop.xlane.xlu0 %1376
    %1378 = vadd.xlane.f32.xlu0 %v1282
    %v1379 = vpop.xlane.xlu0 %1378
    %1380 = vadd.xlane.f32.xlu0 %v1283
    %v1381 = vpop.xlane.xlu0 %1380
    %1382 = vadd.xlane.f32.xlu0 %v1284
    %v1383 = vpop.xlane.xlu0 %1382
    %1384 = vadd.xlane.f32.xlu0 %v1285
    %v1385 = vpop.xlane.xlu0 %1384
    %1386 = vadd.xlane.f32.xlu0 %v1286
    %v1387 = vpop.xlane.xlu0 %1386
    %1388 = vadd.xlane.f32.xlu0 %v1287
    %v1389 = vpop.xlane.xlu0 %1388
    %1390 = vadd.xlane.f32.xlu0 %v1288
    %v1391 = vpop.xlane.xlu0 %1390
    %1392 = vadd.xlane.f32.xlu0 %v1289
    %v1393 = vpop.xlane.xlu0 %1392
    %1394 = vadd.xlane.f32.xlu0 %v1290
    %v1395 = vpop.xlane.xlu0 %1394
    %1396 = vadd.xlane.f32.xlu0 %v1291
    %v1397 = vpop.xlane.xlu0 %1396
    %1398 = vadd.xlane.f32.xlu0 %v1292
    %v1399 = vpop.xlane.xlu0 %1398
    %1400 = vadd.xlane.f32.xlu0 %v1293
    %v1401 = vpop.xlane.xlu0 %1400
    %1402 = vadd.xlane.f32.xlu0 %v1294
    %v1403 = vpop.xlane.xlu0 %1402
    %1404 = vadd.xlane.f32.xlu0 %v1295
    %v1405 = vpop.xlane.xlu0 %1404
    %1406 = vadd.xlane.f32.xlu0 %v1296
    %v1407 = vpop.xlane.xlu0 %1406
    %1408 = vadd.xlane.f32.xlu0 %v1297
    %v1409 = vpop.xlane.xlu0 %1408
    %1410 = vadd.xlane.f32.xlu0 %v1298
    %v1411 = vpop.xlane.xlu0 %1410
    %1412 = vadd.xlane.f32.xlu0 %v1299
    %v1413 = vpop.xlane.xlu0 %1412
    %1414 = vadd.xlane.f32.xlu0 %v1300
    %v1415 = vpop.xlane.xlu0 %1414
    %1416 = vadd.xlane.f32.xlu0 %v1301
    %v1417 = vpop.xlane.xlu0 %1416
    %1418 = vadd.xlane.f32.xlu0 %v1302
    %v1419 = vpop.xlane.xlu0 %1418
    %1420 = vadd.xlane.f32.xlu0 %v1303
    %v1421 = vpop.xlane.xlu0 %1420
    %1422 = vadd.xlane.f32.xlu0 %v1304
    %v1423 = vpop.xlane.xlu0 %1422
    %1424 = vadd.xlane.f32.xlu0 %v1305
    %v1425 = vpop.xlane.xlu0 %1424
    %1426 = vadd.xlane.f32.xlu0 %v1306
    %v1427 = vpop.xlane.xlu0 %1426
    %1428 = vadd.xlane.f32.xlu0 %v1307
    %v1429 = vpop.xlane.xlu0 %1428
    %1430 = vadd.xlane.f32.xlu0 %v1308
    %v1431 = vpop.xlane.xlu0 %1430
    %1432 = vadd.xlane.f32.xlu0 %v1309
    %v1433 = vpop.xlane.xlu0 %1432
    %1434 = vadd.xlane.f32.xlu0 %v1310
    %v1435 = vpop.xlane.xlu0 %1434
    %1436 = vadd.xlane.f32.xlu0 %v1311
    %v1437 = vpop.xlane.xlu0 %1436
    %1438 = vadd.xlane.f32.xlu0 %v1312
    %v1439 = vpop.xlane.xlu0 %1438
    %1440 = vadd.xlane.f32.xlu0 %v1313
    %v1441 = vpop.xlane.xlu0 %1440
    %1442 = vst.msk [vmem:[%s6] sm:$0xff] %vm1178, %v1315
    %1443 = vst.msk [vmem:[%s6 + $0x8] sm:$0xff] %vm1178, %v1317
    %1444 = vst.msk [vmem:[%s6 + $0x10] sm:$0xff] %vm1178, %v1319
    %1445 = vst.msk [vmem:[%s6 + $0x18] sm:$0xff] %vm1178, %v1321
    %1446 = vst.msk [vmem:[%s6 + $0x20] sm:$0xff] %vm1178, %v1323
    %1447 = vst.msk [vmem:[%s6 + $0x28] sm:$0xff] %vm1178, %v1325
    %1448 = vst.msk [vmem:[%s6 + $0x30] sm:$0xff] %vm1178, %v1327
    %1449 = vst.msk [vmem:[%s6 + $0x38] sm:$0xff] %vm1178, %v1329
    %1450 = vst.msk [vmem:[%s6 + $0x40] sm:$0xff] %vm1178, %v1331
    %1451 = vst.msk [vmem:[%s6 + $0x48] sm:$0xff] %vm1178, %v1333
    %1452 = vst.msk [vmem:[%s6 + $0x50] sm:$0xff] %vm1178, %v1335
    %1453 = vst.msk [vmem:[%s6 + $0x58] sm:$0xff] %vm1178, %v1337
    %1454 = vst.msk [vmem:[%s6 + $0x60] sm:$0xff] %vm1178, %v1339
    %1455 = vst.msk [vmem:[%s6 + $0x68] sm:$0xff] %vm1178, %v1341
    %1456 = vst.msk [vmem:[%s6 + $0x70] sm:$0xff] %vm1178, %v1343
    %1457 = vst.msk [vmem:[%s6 + $0x78] sm:$0xff] %vm1178, %v1345
    %1458 = vst.msk [vmem:[%s6 + $0x80] sm:$0xff] %vm1178, %v1347
    %1459 = vst.msk [vmem:[%s6 + $0x88] sm:$0xff] %vm1178, %v1349
    %1460 = vst.msk [vmem:[%s6 + $0x90] sm:$0xff] %vm1178, %v1351
    %1461 = vst.msk [vmem:[%s6 + $0x98] sm:$0xff] %vm1178, %v1353
    %1462 = vst.msk [vmem:[%s6 + $0xa0] sm:$0xff] %vm1178, %v1355
    %1463 = vst.msk [vmem:[%s6 + $0xa8] sm:$0xff] %vm1178, %v1357
    %1464 = vst.msk [vmem:[%s6 + $0xb0] sm:$0xff] %vm1178, %v1359
    %1465 = vst.msk [vmem:[%s6 + $0xb8] sm:$0xff] %vm1178, %v1361
    %1466 = vst.msk [vmem:[%s6 + $0xc0] sm:$0xff] %vm1178, %v1363
    %1467 = vst.msk [vmem:[%s6 + $0xc8] sm:$0xff] %vm1178, %v1365
    %1468 = vst.msk [vmem:[%s6 + $0xd0] sm:$0xff] %vm1178, %v1367
    %1469 = vst.msk [vmem:[%s6 + $0xd8] sm:$0xff] %vm1178, %v1369
    %1470 = vst.msk [vmem:[%s6 + $0xe0] sm:$0xff] %vm1178, %v1371
    %1471 = vst.msk [vmem:[%s6 + $0xe8] sm:$0xff] %vm1178, %v1373
    %1472 = vst.msk [vmem:[%s6 + $0xf0] sm:$0xff] %vm1178, %v1375
    %1473 = vst.msk [vmem:[%s6 + $0xf8] sm:$0xff] %vm1178, %v1377
    %1474 = vst.msk [vmem:[%s6 + $0x100] sm:$0xff] %vm1178, %v1379
    %1475 = vst.msk [vmem:[%s6 + $0x108] sm:$0xff] %vm1178, %v1381
    %1476 = vst.msk [vmem:[%s6 + $0x110] sm:$0xff] %vm1178, %v1383
    %1477 = vst.msk [vmem:[%s6 + $0x118] sm:$0xff] %vm1178, %v1385
    %1478 = vst.msk [vmem:[%s6 + $0x120] sm:$0xff] %vm1178, %v1387
    %1479 = vst.msk [vmem:[%s6 + $0x128] sm:$0xff] %vm1178, %v1389
    %1480 = vst.msk [vmem:[%s6 + $0x130] sm:$0xff] %vm1178, %v1391
    %1481 = vst.msk [vmem:[%s6 + $0x138] sm:$0xff] %vm1178, %v1393
    %1482 = vst.msk [vmem:[%s6 + $0x140] sm:$0xff] %vm1178, %v1395
    %1483 = vst.msk [vmem:[%s6 + $0x148] sm:$0xff] %vm1178, %v1397
    %1484 = vst.msk [vmem:[%s6 + $0x150] sm:$0xff] %vm1178, %v1399
    %1485 = vst.msk [vmem:[%s6 + $0x158] sm:$0xff] %vm1178, %v1401
    %1486 = vst.msk [vmem:[%s6 + $0x160] sm:$0xff] %vm1178, %v1403
    %1487 = vst.msk [vmem:[%s6 + $0x168] sm:$0xff] %vm1178, %v1405
    %1488 = vst.msk [vmem:[%s6 + $0x170] sm:$0xff] %vm1178, %v1407
    %1489 = vst.msk [vmem:[%s6 + $0x178] sm:$0xff] %vm1178, %v1409
    %1490 = vst.msk [vmem:[%s6 + $0x180] sm:$0xff] %vm1178, %v1411
    %1491 = vst.msk [vmem:[%s6 + $0x188] sm:$0xff] %vm1178, %v1413
    %1492 = vst.msk [vmem:[%s6 + $0x190] sm:$0xff] %vm1178, %v1415
    %1493 = vst.msk [vmem:[%s6 + $0x198] sm:$0xff] %vm1178, %v1417
    %1494 = vst.msk [vmem:[%s6 + $0x1a0] sm:$0xff] %vm1178, %v1419
    %1495 = vst.msk [vmem:[%s6 + $0x1a8] sm:$0xff] %vm1178, %v1421
    %1496 = vst.msk [vmem:[%s6 + $0x1b0] sm:$0xff] %vm1178, %v1423
    %1497 = vst.msk [vmem:[%s6 + $0x1b8] sm:$0xff] %vm1178, %v1425
    %1498 = vst.msk [vmem:[%s6 + $0x1c0] sm:$0xff] %vm1178, %v1427
    %1499 = vst.msk [vmem:[%s6 + $0x1c8] sm:$0xff] %vm1178, %v1429
    %1500 = vst.msk [vmem:[%s6 + $0x1d0] sm:$0xff] %vm1178, %v1431
    %1501 = vst.msk [vmem:[%s6 + $0x1d8] sm:$0xff] %vm1178, %v1433
    %1502 = vst.msk [vmem:[%s6 + $0x1e0] sm:$0xff] %vm1178, %v1435
    %1503 = vst.msk [vmem:[%s6 + $0x1e8] sm:$0xff] %vm1178, %v1437
    %1504 = vst.msk [vmem:[%s6 + $0x1f0] sm:$0xff] %vm1178, %v1439
    %1505 = vst.msk [vmem:[%s6 + $0x1f8] sm:$0xff] %vm1178, %v1441
    // Predicated region
    $region26: #{tpu_custom_call.1} parent=1 // pred_check
      _
    $region27: #{tpu_custom_call.1} parent=1 // pred_check_branch
      %1507 = sbr.rel (0) target = $region29
    $region28: #{tpu_custom_call.1} parent=1 // pred_region
      %s1509 = ssub.s32 4096, 4096
      %1510 = vsyncadd [#allocation4], %s1509
      %s1511 = sshll.u32 [#allocation7], 4
      %s1512 = int_to_ptr.vmem [resolvable:$true] %s1511
      %1517 = dma.vmem_to_hbm [thread:$0]  %s1512, 4096, %s4, [#allocation4], 64, 64, 4
    $region29: #{tpu_custom_call.1} parent=1 // pred_fallthru
      _
    // Predicated region
    $region30: #{tpu_custom_call.1} parent=1 // pred_check
      _
    $region31: #{tpu_custom_call.1} parent=1 // pred_check_branch
      %1519 = sbr.rel (0) target = $region33
    $region32: #{tpu_custom_call.1} parent=1 // pred_region
      _
    $region33: #{tpu_custom_call.1} parent=1 // pred_fallthru
      _
    // Predicated region
    $region34: #{tpu_custom_call.1} parent=1 // pred_check
      _
    $region35: #{tpu_custom_call.1} parent=1 // pred_check_branch
      %1521 = sbr.rel (0) target = $region37
    $region36: #{tpu_custom_call.1} parent=1 // pred_region
      _
    $region37: #{tpu_custom_call.1} parent=1 // pred_fallthru
      _
    // Predicated region
    $region38: #{tpu_custom_call.1} parent=1 // pred_check
      _
    $region39: #{tpu_custom_call.1} parent=1 // pred_check_branch
      %1523 = sbr.rel (0) target = $region41
    $region40: #{tpu_custom_call.1} parent=1 // pred_region
      %1524 = dma.done [#allocation4], 4096
    $region41: #{tpu_custom_call.1} parent=1 // pred_fallthru
      _
    // Predicated region
    $region42: #{tpu_custom_call.1} parent=1 // pred_check
      _
    $region43: #{tpu_custom_call.1} parent=1 // pred_check_branch
      %1526 = sbr.rel (0) target = $region45
    $region44: #{tpu_custom_call.1} parent=1 // pred_region
      _
    $region45: #{tpu_custom_call.1} parent=1 // pred_fallthru
      _
    // Predicated region
    $region46: #{tpu_custom_call.1} parent=1 // pred_check
      _
    $region47: #{tpu_custom_call.1} parent=1 // pred_check_branch
      %1528 = sbr.rel (0) target = $region49
    $region48: #{tpu_custom_call.1} parent=1 // pred_region
      _
    $region49: #{tpu_custom_call.1} parent=1 // pred_fallthru
      _
    %1529 = vsyncpa [#allocation3], 1
    %1530 = vsyncpa [#allocation6], 1
    %1531 = vsyncpa [#allocation4], 1

</llo_original>
